<compile_context>
chip_gen: v7x
topology: tpu7x:2x2x1
jax: 0.10.0
libtpu: 0.0.40
codegen_flags: <defaults>
</compile_context>

<pallas_src>
import math
import jax
import jax.numpy as jnp
from jax import lax
from jax.experimental import pallas as pl
from jax.experimental.pallas import tpu as pltpu

NUM_HEADS = 4
D_MODEL = 32
D_K = D_MODEL // NUM_HEADS
SEQ = 8
BATCH = 2


def _pack_params(params):
    """Host-side weight packing: pre-transposed, fused QKV + output weights."""
    wq, bq, wk, bk, wv, bv, wo, bo = params
    d = wq.shape[0]
    z = jnp.zeros((d, d), wq.dtype)
    # block_diag(Wq.T, Wk.T, Wv.T): [q|k|v] @ W_qkv == [q@Wq.T | k@Wk.T | v@Wv.T]
    w_qkv = jnp.block([[wq.T, z, z],
                       [z, wk.T, z],
                       [z, z, wv.T]])                                   # (3D, 3D)
    b_qkv = jnp.concatenate([bq.reshape(1, d),
                             bk.reshape(1, d),
                             bv.reshape(1, d)], axis=-1)                # (1, 3D)
    return w_qkv, b_qkv, wo.T, bo.reshape(1, d)                         # Wo.T is [in, out]


def multi_headed_dot_attention(q, k, v, params, num_heads=NUM_HEADS):
    B, S, D = q.shape
    d_k = D // num_heads
    scale = 1.0 / math.sqrt(d_k)

    w_qkv, b_qkv, wo_t, bo_r = _pack_params(params)
    # Lane-concatenate the three activation streams into one (B*S, 3D) slab.
    x = jnp.concatenate([q.reshape(B * S, D),
                         k.reshape(B * S, D),
                         v.reshape(B * S, D)], axis=-1)

    def kernel(x_ref, wqkv_ref, bqkv_ref, wo_ref, bo_ref, o_ref):
        # x_ref:(B*S,3D)  wqkv_ref:(3D,3D)  bqkv_ref:(1,3D)  wo_ref:(D,D)  bo_ref:(1,D)
        xs = x_ref[...].astype(jnp.float32)

        # Fused q/k/v projection: one MXU push, no in-kernel transposes.
        qkv = jnp.dot(xs, wqkv_ref[...],
                      preferred_element_type=jnp.float32) + bqkv_ref[...]

        wo_full = wo_ref[...]                                    # (D, D) [in, out]
        bias_o = jnp.broadcast_to(bo_ref[...], (S, D)).astype(jnp.float32)  # hoisted

        # TODO(synk): attention-probability dropout (p=0.1) omitted — eval-mode identity.
        # TODO(synk): att_mask / causal masking not implemented (forward defaults).
        for b in range(B):                                       # static, unrolled
            rows = slice(b * S, (b + 1) * S)
            acc = bias_o                                         # fold +bias into acc
            for h in range(num_heads):                           # static, unrolled
                cq = slice(h * d_k, (h + 1) * d_k)
                ck = slice(D + h * d_k, D + (h + 1) * d_k)
                cv = slice(2 * D + h * d_k, 2 * D + (h + 1) * d_k)
                qh = qkv[rows, cq]                               # (S, d_k)
                kh = qkv[rows, ck]
                vh = qkv[rows, cv]

                # scores = qh @ kh^T as a last-dim contraction (no explicit .T)
                s = lax.dot_general(qh, kh, (((1,), (1,)), ((), ())),
                                    preferred_element_type=jnp.float32) * scale
                s = s - jnp.max(s, axis=-1, keepdims=True)
                p = jnp.exp(s)
                p = p * pl.reciprocal(jnp.sum(p, axis=-1, keepdims=True), approx=True)

                head = jnp.dot(p, vh, preferred_element_type=jnp.float32)   # (S, d_k)
                # Fold the head-concat into the output projection: accumulate
                # head @ Wo.T[h*d_k:(h+1)*d_k, :] instead of concatenating lanes.
                acc = acc + jnp.dot(head, wo_full[cq, :],
                                    preferred_element_type=jnp.float32)     # (S, D)
            o_ref[rows, :] = acc.astype(o_ref.dtype)

    # Advisory cost estimate (fused projection + attention + output projection).
    flops = 2 * (B * S) * (3 * D) * (3 * D)
    flops += B * num_heads * (2 * 2 * S * S * d_k + 2 * S * d_k * D)
    transcendentals = B * num_heads * S * (S + 1)                # exp + reciprocal
    bytes_accessed = 4 * (x.size + w_qkv.size + b_qkv.size +
                          wo_t.size + bo_r.size + B * S * D)

    out = pl.pallas_call(
        kernel,
        out_shape=jax.ShapeDtypeStruct((B * S, D), q.dtype),
        grid=(1,),
        in_specs=[pl.BlockSpec((B * S, 3 * D), lambda i: (0, 0)),   # [q|k|v]
                  pl.BlockSpec((3 * D, 3 * D), lambda i: (0, 0)),   # fused W_qkv
                  pl.BlockSpec((1, 3 * D), lambda i: (0, 0)),       # fused bias
                  pl.BlockSpec((D, D), lambda i: (0, 0)),           # Wo.T
                  pl.BlockSpec((1, D), lambda i: (0, 0))],          # bo
        out_specs=pl.BlockSpec((B * S, D), lambda i: (0, 0)),
        compiler_params=pltpu.CompilerParams(dimension_semantics=("arbitrary",)),
        cost_estimate=pl.CostEstimate(flops=flops,
                                      transcendentals=transcendentals,
                                      bytes_accessed=bytes_accessed),
    )(x, w_qkv, b_qkv, wo_t, bo_r)
    return out.reshape(B, S, D)


def reference_mha(q, k, v, params):
    """Pure-JAX reference mirroring the PyTorch forward (eval mode)."""
    wq, bq, wk, bk, wv, bv, wo, bo = params
    B, S, D = q.shape

    def lin(x, w, b):
        return x @ w.T + b.reshape(-1)

    def split_heads(x):  # (B,S,D) -> (B,H,S,dk)
        return x.reshape(B, S, NUM_HEADS, D_K).transpose(0, 2, 1, 3)

    qh = split_heads(lin(q, wq, bq))
    kh = split_heads(lin(k, wk, bk))
    vh = split_heads(lin(v, wv, bv))
    scores = jnp.einsum('bhqd,bhkd->bhqk', qh, kh) / math.sqrt(D_K)
    p = jax.nn.softmax(scores, axis=-1)
    att = jnp.einsum('bhqk,bhkd->bhqd', p, vh)
    att = att.transpose(0, 2, 1, 3).reshape(B, S, D)
    return lin(att, wo, bo)


def init_params(key, d_model):
    ks = jax.random.split(key, 8)
    scale = 1.0 / math.sqrt(d_model)

    def w(k):
        return jax.random.uniform(k, (d_model, d_model), jnp.float32, -scale, scale)

    def b(k):
        return jax.random.uniform(k, (1, d_model), jnp.float32, -scale, scale)

    return (w(ks[0]), b(ks[1]),   # query_linear
            w(ks[2]), b(ks[3]),   # key_linear
            w(ks[4]), b(ks[5]),   # value_linear
            w(ks[6]), b(ks[7]))   # output_linear


if __name__ == "__main__":
    key = jax.random.PRNGKey(0)
    kq, kk, kv, kp = jax.random.split(key, 4)

    q = jax.random.normal(kq, (BATCH, SEQ, D_MODEL), jnp.float32)
    k = jax.random.normal(kk, (BATCH, SEQ, D_MODEL), jnp.float32)
    v = jax.random.normal(kv, (BATCH, SEQ, D_MODEL), jnp.float32)
    params = init_params(kp, D_MODEL)

    out = multi_headed_dot_attention(q, k, v, params)
    out = jax.block_until_ready(out)

    ref = reference_mha(q, k, v, params)
    assert out.shape == (BATCH, SEQ, D_MODEL)
    # Tolerance loosened slightly vs 1e-4: pl.reciprocal(approx=True) in the
    # softmax denominator has ~1e-3 worst-case relative error.
    assert jnp.allclose(out, ref, rtol=5e-3, atol=5e-3), "mismatch vs pure-JAX reference"

    print("KERNEL_OK")
</pallas_src>

<mosaic_0001>
module attributes {stable_mosaic.version = 11 : i64} {
  func.func @kernel(%arg0: i32, %arg1: memref<16x96xf32, #tpu.memory_space<vmem>>, %arg2: memref<96x96xf32, #tpu.memory_space<vmem>>, %arg3: memref<1x96xf32, #tpu.memory_space<vmem>>, %arg4: memref<32x32xf32, #tpu.memory_space<vmem>>, %arg5: memref<1x32xf32, #tpu.memory_space<vmem>>, %arg6: memref<16x32xf32, #tpu.memory_space<vmem>>) attributes {dimension_semantics = [#tpu.dimension_semantics<arbitrary>], iteration_bounds = array<i64: 1>, scalar_prefetch = 0 : i64, scratch_operands = 0 : i64, tpu.core_type = #tpu.core_type<tc>, window_params = [{pipeline_mode = #tpu.pipeline_mode<synchronous>, transform_indices = @transform_0, window_bounds = array<i64: 16, 96>}, {pipeline_mode = #tpu.pipeline_mode<synchronous>, transform_indices = @transform_1, window_bounds = array<i64: 96, 96>}, {pipeline_mode = #tpu.pipeline_mode<synchronous>, transform_indices = @transform_2, window_bounds = array<i64: 1, 96>}, {pipeline_mode = #tpu.pipeline_mode<synchronous>, transform_indices = @transform_3, window_bounds = array<i64: 32, 32>}, {pipeline_mode = #tpu.pipeline_mode<synchronous>, transform_indices = @transform_4, window_bounds = array<i64: 1, 32>}, {pipeline_mode = #tpu.pipeline_mode<synchronous>, transform_indices = @transform_5, window_bounds = array<i64: 16, 32>}]} {
    %c0 = arith.constant 0 : index
    %c0_0 = arith.constant 0 : index
    %0 = vector.load %arg1[%c0, %c0_0] : memref<16x96xf32, #tpu.memory_space<vmem>>, vector<16x96xf32>
    %c0_1 = arith.constant 0 : index
    %c0_2 = arith.constant 0 : index
    %1 = vector.load %arg2[%c0_1, %c0_2] : memref<96x96xf32, #tpu.memory_space<vmem>>, vector<96x96xf32>
    %cst = arith.constant dense<0.000000e+00> : vector<16x96xf32>
    %2 = tpu.matmul %0, %1, %cst {dimension_numbers = #tpu.dot_dimension_numbers<[1], [0], [0], [1], [0, 0, 1, 1], [], []>} : vector<16x96xf32>, vector<96x96xf32>, vector<16x96xf32> -> vector<16x96xf32>
    %c0_3 = arith.constant 0 : index
    %c0_4 = arith.constant 0 : index
    %3 = vector.load %arg3[%c0_3, %c0_4] : memref<1x96xf32, #tpu.memory_space<vmem>>, vector<1x96xf32>
    %4 = vector.broadcast %3 : vector<1x96xf32> to vector<16x96xf32>
    %5 = arith.addf %2, %4 : vector<16x96xf32>
    %c0_5 = arith.constant 0 : index
    %c0_6 = arith.constant 0 : index
    %6 = vector.load %arg4[%c0_5, %c0_6] : memref<32x32xf32, #tpu.memory_space<vmem>>, vector<32x32xf32>
    %c0_7 = arith.constant 0 : index
    %c0_8 = arith.constant 0 : index
    %7 = vector.load %arg5[%c0_7, %c0_8] : memref<1x32xf32, #tpu.memory_space<vmem>>, vector<1x32xf32>
    %8 = vector.shape_cast %7 : vector<1x32xf32> to vector<1x32xf32>
    %9 = vector.broadcast %8 : vector<1x32xf32> to vector<8x32xf32>
    %10 = vector.extract_strided_slice %5 {offsets = [0, 0], sizes = [8, 8], strides = [1, 1]} : vector<16x96xf32> to vector<8x8xf32>
    %11 = vector.extract_strided_slice %5 {offsets = [0, 32], sizes = [8, 8], strides = [1, 1]} : vector<16x96xf32> to vector<8x8xf32>
    %12 = vector.extract_strided_slice %5 {offsets = [0, 64], sizes = [8, 8], strides = [1, 1]} : vector<16x96xf32> to vector<8x8xf32>
    %cst_9 = arith.constant dense<0.000000e+00> : vector<8x8xf32>
    %13 = tpu.matmul %10, %11, %cst_9 {dimension_numbers = #tpu.dot_dimension_numbers<[1], [1], [0], [0], [0, 0, 1, 0], [], []>} : vector<8x8xf32>, vector<8x8xf32>, vector<8x8xf32> -> vector<8x8xf32>
    %cst_10 = arith.constant 0.353553385 : f32
    %14 = vector.broadcast %cst_10 : f32 to vector<8x8xf32>
    %15 = arith.mulf %13, %14 : vector<8x8xf32>
    %cst_11 = arith.constant dense<0xFF800000> : vector<8xf32>
    %16 = vector.multi_reduction <maximumf>, %15, %cst_11 [1] : vector<8x8xf32> to vector<8xf32>
    %17 = vector.shape_cast %16 : vector<8xf32> to vector<8x1xf32>
    %18 = vector.broadcast %17 : vector<8x1xf32> to vector<8x8xf32>
    %19 = arith.subf %15, %18 : vector<8x8xf32>
    %20 = math.exp %19 : vector<8x8xf32>
    %cst_12 = arith.constant dense<0.000000e+00> : vector<8xf32>
    %21 = vector.multi_reduction <add>, %20, %cst_12 [1] : vector<8x8xf32> to vector<8xf32>
    %22 = vector.shape_cast %21 : vector<8xf32> to vector<8x1xf32>
    %23 = tpu.reciprocal %22 {approx = true} : vector<8x1xf32> -> vector<8x1xf32>
    %24 = vector.broadcast %23 : vector<8x1xf32> to vector<8x8xf32>
    %25 = arith.mulf %20, %24 : vector<8x8xf32>
    %cst_13 = arith.constant dense<0.000000e+00> : vector<8x8xf32>
    %26 = tpu.matmul %25, %12, %cst_13 {dimension_numbers = #tpu.dot_dimension_numbers<[1], [0], [0], [1], [0, 0, 1, 1], [], []>} : vector<8x8xf32>, vector<8x8xf32>, vector<8x8xf32> -> vector<8x8xf32>
    %27 = vector.extract_strided_slice %6 {offsets = [0, 0], sizes = [8, 32], strides = [1, 1]} : vector<32x32xf32> to vector<8x32xf32>
    %cst_14 = arith.constant dense<0.000000e+00> : vector<8x32xf32>
    %28 = tpu.matmul %26, %27, %cst_14 {dimension_numbers = #tpu.dot_dimension_numbers<[1], [0], [0], [1], [0, 0, 1, 1], [], []>} : vector<8x8xf32>, vector<8x32xf32>, vector<8x32xf32> -> vector<8x32xf32>
    %29 = arith.addf %9, %28 : vector<8x32xf32>
    %30 = vector.extract_strided_slice %5 {offsets = [0, 8], sizes = [8, 8], strides = [1, 1]} : vector<16x96xf32> to vector<8x8xf32>
    %31 = vector.extract_strided_slice %5 {offsets = [0, 40], sizes = [8, 8], strides = [1, 1]} : vector<16x96xf32> to vector<8x8xf32>
    %32 = vector.extract_strided_slice %5 {offsets = [0, 72], sizes = [8, 8], strides = [1, 1]} : vector<16x96xf32> to vector<8x8xf32>
    %cst_15 = arith.constant dense<0.000000e+00> : vector<8x8xf32>
    %33 = tpu.matmul %30, %31, %cst_15 {dimension_numbers = #tpu.dot_dimension_numbers<[1], [1], [0], [0], [0, 0, 1, 0], [], []>} : vector<8x8xf32>, vector<8x8xf32>, vector<8x8xf32> -> vector<8x8xf32>
    %cst_16 = arith.constant 0.353553385 : f32
    %34 = vector.broadcast %cst_16 : f32 to vector<8x8xf32>
    %35 = arith.mulf %33, %34 : vector<8x8xf32>
    %cst_17 = arith.constant dense<0xFF800000> : vector<8xf32>
    %36 = vector.multi_reduction <maximumf>, %35, %cst_17 [1] : vector<8x8xf32> to vector<8xf32>
    %37 = vector.shape_cast %36 : vector<8xf32> to vector<8x1xf32>
    %38 = vector.broadcast %37 : vector<8x1xf32> to vector<8x8xf32>
    %39 = arith.subf %35, %38 : vector<8x8xf32>
    %40 = math.exp %39 : vector<8x8xf32>
    %cst_18 = arith.constant dense<0.000000e+00> : vector<8xf32>
    %41 = vector.multi_reduction <add>, %40, %cst_18 [1] : vector<8x8xf32> to vector<8xf32>
    %42 = vector.shape_cast %41 : vector<8xf32> to vector<8x1xf32>
    %43 = tpu.reciprocal %42 {approx = true} : vector<8x1xf32> -> vector<8x1xf32>
    %44 = vector.broadcast %43 : vector<8x1xf32> to vector<8x8xf32>
    %45 = arith.mulf %40, %44 : vector<8x8xf32>
    %cst_19 = arith.constant dense<0.000000e+00> : vector<8x8xf32>
    %46 = tpu.matmul %45, %32, %cst_19 {dimension_numbers = #tpu.dot_dimension_numbers<[1], [0], [0], [1], [0, 0, 1, 1], [], []>} : vector<8x8xf32>, vector<8x8xf32>, vector<8x8xf32> -> vector<8x8xf32>
    %47 = vector.extract_strided_slice %6 {offsets = [8, 0], sizes = [8, 32], strides = [1, 1]} : vector<32x32xf32> to vector<8x32xf32>
    %cst_20 = arith.constant dense<0.000000e+00> : vector<8x32xf32>
    %48 = tpu.matmul %46, %47, %cst_20 {dimension_numbers = #tpu.dot_dimension_numbers<[1], [0], [0], [1], [0, 0, 1, 1], [], []>} : vector<8x8xf32>, vector<8x32xf32>, vector<8x32xf32> -> vector<8x32xf32>
    %49 = arith.addf %29, %48 : vector<8x32xf32>
    %50 = vector.extract_strided_slice %5 {offsets = [0, 16], sizes = [8, 8], strides = [1, 1]} : vector<16x96xf32> to vector<8x8xf32>
    %51 = vector.extract_strided_slice %5 {offsets = [0, 48], sizes = [8, 8], strides = [1, 1]} : vector<16x96xf32> to vector<8x8xf32>
    %52 = vector.extract_strided_slice %5 {offsets = [0, 80], sizes = [8, 8], strides = [1, 1]} : vector<16x96xf32> to vector<8x8xf32>
    %cst_21 = arith.constant dense<0.000000e+00> : vector<8x8xf32>
    %53 = tpu.matmul %50, %51, %cst_21 {dimension_numbers = #tpu.dot_dimension_numbers<[1], [1], [0], [0], [0, 0, 1, 0], [], []>} : vector<8x8xf32>, vector<8x8xf32>, vector<8x8xf32> -> vector<8x8xf32>
    %cst_22 = arith.constant 0.353553385 : f32
    %54 = vector.broadcast %cst_22 : f32 to vector<8x8xf32>
    %55 = arith.mulf %53, %54 : vector<8x8xf32>
    %cst_23 = arith.constant dense<0xFF800000> : vector<8xf32>
    %56 = vector.multi_reduction <maximumf>, %55, %cst_23 [1] : vector<8x8xf32> to vector<8xf32>
    %57 = vector.shape_cast %56 : vector<8xf32> to vector<8x1xf32>
    %58 = vector.broadcast %57 : vector<8x1xf32> to vector<8x8xf32>
    %59 = arith.subf %55, %58 : vector<8x8xf32>
    %60 = math.exp %59 : vector<8x8xf32>
    %cst_24 = arith.constant dense<0.000000e+00> : vector<8xf32>
    %61 = vector.multi_reduction <add>, %60, %cst_24 [1] : vector<8x8xf32> to vector<8xf32>
    %62 = vector.shape_cast %61 : vector<8xf32> to vector<8x1xf32>
    %63 = tpu.reciprocal %62 {approx = true} : vector<8x1xf32> -> vector<8x1xf32>
    %64 = vector.broadcast %63 : vector<8x1xf32> to vector<8x8xf32>
    %65 = arith.mulf %60, %64 : vector<8x8xf32>
    %cst_25 = arith.constant dense<0.000000e+00> : vector<8x8xf32>
    %66 = tpu.matmul %65, %52, %cst_25 {dimension_numbers = #tpu.dot_dimension_numbers<[1], [0], [0], [1], [0, 0, 1, 1], [], []>} : vector<8x8xf32>, vector<8x8xf32>, vector<8x8xf32> -> vector<8x8xf32>
    %67 = vector.extract_strided_slice %6 {offsets = [16, 0], sizes = [8, 32], strides = [1, 1]} : vector<32x32xf32> to vector<8x32xf32>
    %cst_26 = arith.constant dense<0.000000e+00> : vector<8x32xf32>
    %68 = tpu.matmul %66, %67, %cst_26 {dimension_numbers = #tpu.dot_dimension_numbers<[1], [0], [0], [1], [0, 0, 1, 1], [], []>} : vector<8x8xf32>, vector<8x32xf32>, vector<8x32xf32> -> vector<8x32xf32>
    %69 = arith.addf %49, %68 : vector<8x32xf32>
    %70 = vector.extract_strided_slice %5 {offsets = [0, 24], sizes = [8, 8], strides = [1, 1]} : vector<16x96xf32> to vector<8x8xf32>
    %71 = vector.extract_strided_slice %5 {offsets = [0, 56], sizes = [8, 8], strides = [1, 1]} : vector<16x96xf32> to vector<8x8xf32>
    %72 = vector.extract_strided_slice %5 {offsets = [0, 88], sizes = [8, 8], strides = [1, 1]} : vector<16x96xf32> to vector<8x8xf32>
    %cst_27 = arith.constant dense<0.000000e+00> : vector<8x8xf32>
    %73 = tpu.matmul %70, %71, %cst_27 {dimension_numbers = #tpu.dot_dimension_numbers<[1], [1], [0], [0], [0, 0, 1, 0], [], []>} : vector<8x8xf32>, vector<8x8xf32>, vector<8x8xf32> -> vector<8x8xf32>
    %cst_28 = arith.constant 0.353553385 : f32
    %74 = vector.broadcast %cst_28 : f32 to vector<8x8xf32>
    %75 = arith.mulf %73, %74 : vector<8x8xf32>
    %cst_29 = arith.constant dense<0xFF800000> : vector<8xf32>
    %76 = vector.multi_reduction <maximumf>, %75, %cst_29 [1] : vector<8x8xf32> to vector<8xf32>
    %77 = vector.shape_cast %76 : vector<8xf32> to vector<8x1xf32>
    %78 = vector.broadcast %77 : vector<8x1xf32> to vector<8x8xf32>
    %79 = arith.subf %75, %78 : vector<8x8xf32>
    %80 = math.exp %79 : vector<8x8xf32>
    %cst_30 = arith.constant dense<0.000000e+00> : vector<8xf32>
    %81 = vector.multi_reduction <add>, %80, %cst_30 [1] : vector<8x8xf32> to vector<8xf32>
    %82 = vector.shape_cast %81 : vector<8xf32> to vector<8x1xf32>
    %83 = tpu.reciprocal %82 {approx = true} : vector<8x1xf32> -> vector<8x1xf32>
    %84 = vector.broadcast %83 : vector<8x1xf32> to vector<8x8xf32>
    %85 = arith.mulf %80, %84 : vector<8x8xf32>
    %cst_31 = arith.constant dense<0.000000e+00> : vector<8x8xf32>
    %86 = tpu.matmul %85, %72, %cst_31 {dimension_numbers = #tpu.dot_dimension_numbers<[1], [0], [0], [1], [0, 0, 1, 1], [], []>} : vector<8x8xf32>, vector<8x8xf32>, vector<8x8xf32> -> vector<8x8xf32>
    %87 = vector.extract_strided_slice %6 {offsets = [24, 0], sizes = [8, 32], strides = [1, 1]} : vector<32x32xf32> to vector<8x32xf32>
    %cst_32 = arith.constant dense<0.000000e+00> : vector<8x32xf32>
    %88 = tpu.matmul %86, %87, %cst_32 {dimension_numbers = #tpu.dot_dimension_numbers<[1], [0], [0], [1], [0, 0, 1, 1], [], []>} : vector<8x8xf32>, vector<8x32xf32>, vector<8x32xf32> -> vector<8x32xf32>
    %89 = arith.addf %69, %88 : vector<8x32xf32>
    %c0_33 = arith.constant 0 : index
    %c0_34 = arith.constant 0 : index
    %90 = vector.load %arg6[%c0_33, %c0_34] : memref<16x32xf32, #tpu.memory_space<vmem>>, vector<8x32xf32>
    tpu.vector_store %arg6[%c0_33, %c0_34], %89 {strides = array<i32>} : memref<16x32xf32, #tpu.memory_space<vmem>>, vector<8x32xf32>,
    %91 = vector.extract_strided_slice %5 {offsets = [8, 0], sizes = [8, 8], strides = [1, 1]} : vector<16x96xf32> to vector<8x8xf32>
    %92 = vector.extract_strided_slice %5 {offsets = [8, 32], sizes = [8, 8], strides = [1, 1]} : vector<16x96xf32> to vector<8x8xf32>
    %93 = vector.extract_strided_slice %5 {offsets = [8, 64], sizes = [8, 8], strides = [1, 1]} : vector<16x96xf32> to vector<8x8xf32>
    %cst_35 = arith.constant dense<0.000000e+00> : vector<8x8xf32>
    %94 = tpu.matmul %91, %92, %cst_35 {dimension_numbers = #tpu.dot_dimension_numbers<[1], [1], [0], [0], [0, 0, 1, 0], [], []>} : vector<8x8xf32>, vector<8x8xf32>, vector<8x8xf32> -> vector<8x8xf32>
    %cst_36 = arith.constant 0.353553385 : f32
    %95 = vector.broadcast %cst_36 : f32 to vector<8x8xf32>
    %96 = arith.mulf %94, %95 : vector<8x8xf32>
    %cst_37 = arith.constant dense<0xFF800000> : vector<8xf32>
    %97 = vector.multi_reduction <maximumf>, %96, %cst_37 [1] : vector<8x8xf32> to vector<8xf32>
    %98 = vector.shape_cast %97 : vector<8xf32> to vector<8x1xf32>
    %99 = vector.broadcast %98 : vector<8x1xf32> to vector<8x8xf32>
    %100 = arith.subf %96, %99 : vector<8x8xf32>
    %101 = math.exp %100 : vector<8x8xf32>
    %cst_38 = arith.constant dense<0.000000e+00> : vector<8xf32>
    %102 = vector.multi_reduction <add>, %101, %cst_38 [1] : vector<8x8xf32> to vector<8xf32>
    %103 = vector.shape_cast %102 : vector<8xf32> to vector<8x1xf32>
    %104 = tpu.reciprocal %103 {approx = true} : vector<8x1xf32> -> vector<8x1xf32>
    %105 = vector.broadcast %104 : vector<8x1xf32> to vector<8x8xf32>
    %106 = arith.mulf %101, %105 : vector<8x8xf32>
    %cst_39 = arith.constant dense<0.000000e+00> : vector<8x8xf32>
    %107 = tpu.matmul %106, %93, %cst_39 {dimension_numbers = #tpu.dot_dimension_numbers<[1], [0], [0], [1], [0, 0, 1, 1], [], []>} : vector<8x8xf32>, vector<8x8xf32>, vector<8x8xf32> -> vector<8x8xf32>
    %108 = vector.extract_strided_slice %6 {offsets = [0, 0], sizes = [8, 32], strides = [1, 1]} : vector<32x32xf32> to vector<8x32xf32>
    %cst_40 = arith.constant dense<0.000000e+00> : vector<8x32xf32>
    %109 = tpu.matmul %107, %108, %cst_40 {dimension_numbers = #tpu.dot_dimension_numbers<[1], [0], [0], [1], [0, 0, 1, 1], [], []>} : vector<8x8xf32>, vector<8x32xf32>, vector<8x32xf32> -> vector<8x32xf32>
    %110 = arith.addf %9, %109 : vector<8x32xf32>
    %111 = vector.extract_strided_slice %5 {offsets = [8, 8], sizes = [8, 8], strides = [1, 1]} : vector<16x96xf32> to vector<8x8xf32>
    %112 = vector.extract_strided_slice %5 {offsets = [8, 40], sizes = [8, 8], strides = [1, 1]} : vector<16x96xf32> to vector<8x8xf32>
    %113 = vector.extract_strided_slice %5 {offsets = [8, 72], sizes = [8, 8], strides = [1, 1]} : vector<16x96xf32> to vector<8x8xf32>
    %cst_41 = arith.constant dense<0.000000e+00> : vector<8x8xf32>
    %114 = tpu.matmul %111, %112, %cst_41 {dimension_numbers = #tpu.dot_dimension_numbers<[1], [1], [0], [0], [0, 0, 1, 0], [], []>} : vector<8x8xf32>, vector<8x8xf32>, vector<8x8xf32> -> vector<8x8xf32>
    %cst_42 = arith.constant 0.353553385 : f32
    %115 = vector.broadcast %cst_42 : f32 to vector<8x8xf32>
    %116 = arith.mulf %114, %115 : vector<8x8xf32>
    %cst_43 = arith.constant dense<0xFF800000> : vector<8xf32>
    %117 = vector.multi_reduction <maximumf>, %116, %cst_43 [1] : vector<8x8xf32> to vector<8xf32>
    %118 = vector.shape_cast %117 : vector<8xf32> to vector<8x1xf32>
    %119 = vector.broadcast %118 : vector<8x1xf32> to vector<8x8xf32>
    %120 = arith.subf %116, %119 : vector<8x8xf32>
    %121 = math.exp %120 : vector<8x8xf32>
    %cst_44 = arith.constant dense<0.000000e+00> : vector<8xf32>
    %122 = vector.multi_reduction <add>, %121, %cst_44 [1] : vector<8x8xf32> to vector<8xf32>
    %123 = vector.shape_cast %122 : vector<8xf32> to vector<8x1xf32>
    %124 = tpu.reciprocal %123 {approx = true} : vector<8x1xf32> -> vector<8x1xf32>
    %125 = vector.broadcast %124 : vector<8x1xf32> to vector<8x8xf32>
    %126 = arith.mulf %121, %125 : vector<8x8xf32>
    %cst_45 = arith.constant dense<0.000000e+00> : vector<8x8xf32>
    %127 = tpu.matmul %126, %113, %cst_45 {dimension_numbers = #tpu.dot_dimension_numbers<[1], [0], [0], [1], [0, 0, 1, 1], [], []>} : vector<8x8xf32>, vector<8x8xf32>, vector<8x8xf32> -> vector<8x8xf32>
    %128 = vector.extract_strided_slice %6 {offsets = [8, 0], sizes = [8, 32], strides = [1, 1]} : vector<32x32xf32> to vector<8x32xf32>
    %cst_46 = arith.constant dense<0.000000e+00> : vector<8x32xf32>
    %129 = tpu.matmul %127, %128, %cst_46 {dimension_numbers = #tpu.dot_dimension_numbers<[1], [0], [0], [1], [0, 0, 1, 1], [], []>} : vector<8x8xf32>, vector<8x32xf32>, vector<8x32xf32> -> vector<8x32xf32>
    %130 = arith.addf %110, %129 : vector<8x32xf32>
    %131 = vector.extract_strided_slice %5 {offsets = [8, 16], sizes = [8, 8], strides = [1, 1]} : vector<16x96xf32> to vector<8x8xf32>
    %132 = vector.extract_strided_slice %5 {offsets = [8, 48], sizes = [8, 8], strides = [1, 1]} : vector<16x96xf32> to vector<8x8xf32>
    %133 = vector.extract_strided_slice %5 {offsets = [8, 80], sizes = [8, 8], strides = [1, 1]} : vector<16x96xf32> to vector<8x8xf32>
    %cst_47 = arith.constant dense<0.000000e+00> : vector<8x8xf32>
    %134 = tpu.matmul %131, %132, %cst_47 {dimension_numbers = #tpu.dot_dimension_numbers<[1], [1], [0], [0], [0, 0, 1, 0], [], []>} : vector<8x8xf32>, vector<8x8xf32>, vector<8x8xf32> -> vector<8x8xf32>
    %cst_48 = arith.constant 0.353553385 : f32
    %135 = vector.broadcast %cst_48 : f32 to vector<8x8xf32>
    %136 = arith.mulf %134, %135 : vector<8x8xf32>
    %cst_49 = arith.constant dense<0xFF800000> : vector<8xf32>
    %137 = vector.multi_reduction <maximumf>, %136, %cst_49 [1] : vector<8x8xf32> to vector<8xf32>
    %138 = vector.shape_cast %137 : vector<8xf32> to vector<8x1xf32>
    %139 = vector.broadcast %138 : vector<8x1xf32> to vector<8x8xf32>
    %140 = arith.subf %136, %139 : vector<8x8xf32>
    %141 = math.exp %140 : vector<8x8xf32>
    %cst_50 = arith.constant dense<0.000000e+00> : vector<8xf32>
    %142 = vector.multi_reduction <add>, %141, %cst_50 [1] : vector<8x8xf32> to vector<8xf32>
    %143 = vector.shape_cast %142 : vector<8xf32> to vector<8x1xf32>
    %144 = tpu.reciprocal %143 {approx = true} : vector<8x1xf32> -> vector<8x1xf32>
    %145 = vector.broadcast %144 : vector<8x1xf32> to vector<8x8xf32>
    %146 = arith.mulf %141, %145 : vector<8x8xf32>
    %cst_51 = arith.constant dense<0.000000e+00> : vector<8x8xf32>
    %147 = tpu.matmul %146, %133, %cst_51 {dimension_numbers = #tpu.dot_dimension_numbers<[1], [0], [0], [1], [0, 0, 1, 1], [], []>} : vector<8x8xf32>, vector<8x8xf32>, vector<8x8xf32> -> vector<8x8xf32>
    %148 = vector.extract_strided_slice %6 {offsets = [16, 0], sizes = [8, 32], strides = [1, 1]} : vector<32x32xf32> to vector<8x32xf32>
    %cst_52 = arith.constant dense<0.000000e+00> : vector<8x32xf32>
    %149 = tpu.matmul %147, %148, %cst_52 {dimension_numbers = #tpu.dot_dimension_numbers<[1], [0], [0], [1], [0, 0, 1, 1], [], []>} : vector<8x8xf32>, vector<8x32xf32>, vector<8x32xf32> -> vector<8x32xf32>
    %150 = arith.addf %130, %149 : vector<8x32xf32>
    %151 = vector.extract_strided_slice %5 {offsets = [8, 24], sizes = [8, 8], strides = [1, 1]} : vector<16x96xf32> to vector<8x8xf32>
    %152 = vector.extract_strided_slice %5 {offsets = [8, 56], sizes = [8, 8], strides = [1, 1]} : vector<16x96xf32> to vector<8x8xf32>
    %153 = vector.extract_strided_slice %5 {offsets = [8, 88], sizes = [8, 8], strides = [1, 1]} : vector<16x96xf32> to vector<8x8xf32>
    %cst_53 = arith.constant dense<0.000000e+00> : vector<8x8xf32>
    %154 = tpu.matmul %151, %152, %cst_53 {dimension_numbers = #tpu.dot_dimension_numbers<[1], [1], [0], [0], [0, 0, 1, 0], [], []>} : vector<8x8xf32>, vector<8x8xf32>, vector<8x8xf32> -> vector<8x8xf32>
    %cst_54 = arith.constant 0.353553385 : f32
    %155 = vector.broadcast %cst_54 : f32 to vector<8x8xf32>
    %156 = arith.mulf %154, %155 : vector<8x8xf32>
    %cst_55 = arith.constant dense<0xFF800000> : vector<8xf32>
    %157 = vector.multi_reduction <maximumf>, %156, %cst_55 [1] : vector<8x8xf32> to vector<8xf32>
    %158 = vector.shape_cast %157 : vector<8xf32> to vector<8x1xf32>
    %159 = vector.broadcast %158 : vector<8x1xf32> to vector<8x8xf32>
    %160 = arith.subf %156, %159 : vector<8x8xf32>
    %161 = math.exp %160 : vector<8x8xf32>
    %cst_56 = arith.constant dense<0.000000e+00> : vector<8xf32>
    %162 = vector.multi_reduction <add>, %161, %cst_56 [1] : vector<8x8xf32> to vector<8xf32>
    %163 = vector.shape_cast %162 : vector<8xf32> to vector<8x1xf32>
    %164 = tpu.reciprocal %163 {approx = true} : vector<8x1xf32> -> vector<8x1xf32>
    %165 = vector.broadcast %164 : vector<8x1xf32> to vector<8x8xf32>
    %166 = arith.mulf %161, %165 : vector<8x8xf32>
    %cst_57 = arith.constant dense<0.000000e+00> : vector<8x8xf32>
    %167 = tpu.matmul %166, %153, %cst_57 {dimension_numbers = #tpu.dot_dimension_numbers<[1], [0], [0], [1], [0, 0, 1, 1], [], []>} : vector<8x8xf32>, vector<8x8xf32>, vector<8x8xf32> -> vector<8x8xf32>
    %168 = vector.extract_strided_slice %6 {offsets = [24, 0], sizes = [8, 32], strides = [1, 1]} : vector<32x32xf32> to vector<8x32xf32>
    %cst_58 = arith.constant dense<0.000000e+00> : vector<8x32xf32>
    %169 = tpu.matmul %167, %168, %cst_58 {dimension_numbers = #tpu.dot_dimension_numbers<[1], [0], [0], [1], [0, 0, 1, 1], [], []>} : vector<8x8xf32>, vector<8x32xf32>, vector<8x32xf32> -> vector<8x32xf32>
    %170 = arith.addf %150, %169 : vector<8x32xf32>
    %c8 = arith.constant 8 : index
    %c0_59 = arith.constant 0 : index
    %171 = vector.load %arg6[%c8, %c0_59] : memref<16x32xf32, #tpu.memory_space<vmem>>, vector<8x32xf32>
    tpu.vector_store %arg6[%c8, %c0_59], %170 {strides = array<i32>} : memref<16x32xf32, #tpu.memory_space<vmem>>, vector<8x32xf32>,
    return
  }
  func.func @transform_0(%arg0: i32) -> (i32, i32) {
    %c0_i32 = arith.constant 0 : i32
    %c0_i32_0 = arith.constant 0 : i32
    %c0_i32_1 = arith.constant 0 : i32
    return %c0_i32, %c0_i32_0 : i32, i32
  }
  func.func @transform_1(%arg0: i32) -> (i32, i32) {
    %c0_i32 = arith.constant 0 : i32
    %c0_i32_0 = arith.constant 0 : i32
    %c0_i32_1 = arith.constant 0 : i32
    return %c0_i32, %c0_i32_0 : i32, i32
  }
  func.func @transform_2(%arg0: i32) -> (i32, i32) {
    %c0_i32 = arith.constant 0 : i32
    %c0_i32_0 = arith.constant 0 : i32
    %c0_i32_1 = arith.constant 0 : i32
    return %c0_i32, %c0_i32_0 : i32, i32
  }
  func.func @transform_3(%arg0: i32) -> (i32, i32) {
    %c0_i32 = arith.constant 0 : i32
    %c0_i32_0 = arith.constant 0 : i32
    %c0_i32_1 = arith.constant 0 : i32
    return %c0_i32, %c0_i32_0 : i32, i32
  }
  func.func @transform_4(%arg0: i32) -> (i32, i32) {
    %c0_i32 = arith.constant 0 : i32
    %c0_i32_0 = arith.constant 0 : i32
    %c0_i32_1 = arith.constant 0 : i32
    return %c0_i32, %c0_i32_0 : i32, i32
  }
  func.func @transform_5(%arg0: i32) -> (i32, i32) {
    %c0_i32 = arith.constant 0 : i32
    %c0_i32_0 = arith.constant 0 : i32
    %c0_i32_1 = arith.constant 0 : i32
    return %c0_i32, %c0_i32_0 : i32, i32
  }
}

</mosaic_0001>

<llo_original>
// kernel: tpu_custom_call.1
$region0: #{tpu_custom_call.1}
  #allocation0 [shape = 'u32[]', space=smem, size = 0x4, offset = 0x4, fixed_abs, tag = 'smem constant byte address 0x4 - core index']
  #allocation1 [shape = 'u32[144,128]{1,0:T(1,128)}', space=vmem, size = 0x12000, scoped, tag = 'internal scratch']
  %s0 = inlined_call_operand.hbm [shape: f32[16,96], index: 0, kind: input, shape index: {}]
  %s1 = inlined_call_operand.hbm [shape: f32[96,96], index: 1, kind: input, shape index: {}]
  %s2 = inlined_call_operand.vmem [shape: f32[1,96], index: 2, kind: input, shape index: {}]
  %s3 = inlined_call_operand.hbm [shape: f32[32,32], index: 3, kind: input, shape index: {}]
  %s4 = inlined_call_operand.vmem [shape: f32[1,32], index: 4, kind: input, shape index: {}]
  %s5 = inlined_call_operand.hbm [shape: f32[16,32], index: 5, kind: output, shape index: {}]
  %s6 = sld [smem:[#allocation0]]
  $region42: #{tpu_custom_call.1} parent=0
    _
  %s8 = ssub.s32 1, %s6
  %s9 = scalar_select 0, %s8, %s6
  $region1: #{tpu_custom_call.1} parent=0
    #allocation2 [shape = 'u8[8192]{0}', space=vmem, size = 0x2000, scoped, tag = 'input window, operand 0, single buffered']
    #allocation3 [shape = 's32[1]{0}', space=sflag, size = 0x4, scoped, tag = 'scoped memory for tpu_custom_call.1']
    #allocation4 [shape = 's32[1]{0}', space=sflag, size = 0x4, scoped, tag = 'scoped memory for tpu_custom_call.1']
    #allocation5 [shape = 'u8[49152]{0}', space=vmem, size = 0xc000, scoped, tag = 'input window, operand 1, single buffered']
    #allocation6 [shape = 's32[1]{0}', space=sflag, size = 0x4, scoped, tag = 'scoped memory for tpu_custom_call.1']
    #allocation7 [shape = 'u8[16384]{0}', space=vmem, size = 0x4000, scoped, tag = 'input window, operand 3, single buffered']
    #allocation8 [shape = 'u8[8192]{0}', space=vmem, size = 0x2000, scoped, tag = 'output window, operand 0, single buffered']
    %10 = vsyncpa [#allocation3], 0
    %11 = vsyncpa [#allocation6], 0
    %12 = vsyncpa [#allocation4], 0
    // Predicated region
    $region2: #{tpu_custom_call.1} parent=1 // pred_check
      _
    $region3: #{tpu_custom_call.1} parent=1 // pred_check_branch
      %14 = sbr.rel (0) target = $region5
    $region4: #{tpu_custom_call.1} parent=1 // pred_region
      %s16 = ssub.s32 256, 256
      %17 = vsyncadd [#allocation3], %s16
      %s18 = sshll.u32 [#allocation2], 4
      %s19 = int_to_ptr.vmem [resolvable:$true] %s18
      %24 = dma.hbm_to_vmem [thread:$0]  %s0, 256, %s19, [#allocation3], 128, 128, 8
    $region5: #{tpu_custom_call.1} parent=1 // pred_fallthru
      _
    // Predicated region
    $region6: #{tpu_custom_call.1} parent=1 // pred_check
      _
    $region7: #{tpu_custom_call.1} parent=1 // pred_check_branch
      %26 = sbr.rel (0) target = $region9
    $region8: #{tpu_custom_call.1} parent=1 // pred_region
      %s28 = ssub.s32 1536, 1536
      %29 = vsyncadd [#allocation6], %s28
      %s30 = sshll.u32 [#allocation5], 4
      %s31 = int_to_ptr.vmem [resolvable:$true] %s30
      %36 = dma.hbm_to_vmem [thread:$0]  %s1, 1536, %s31, [#allocation6], 128, 128, 8
    $region9: #{tpu_custom_call.1} parent=1 // pred_fallthru
      _
    // Predicated region
    $region10: #{tpu_custom_call.1} parent=1 // pred_check
      _
    $region11: #{tpu_custom_call.1} parent=1 // pred_check_branch
      %38 = sbr.rel (0) target = $region13
    $region12: #{tpu_custom_call.1} parent=1 // pred_region
      _
    $region13: #{tpu_custom_call.1} parent=1 // pred_fallthru
      _
    // Predicated region
    $region14: #{tpu_custom_call.1} parent=1 // pred_check
      _
    $region15: #{tpu_custom_call.1} parent=1 // pred_check_branch
      %40 = sbr.rel (0) target = $region17
    $region16: #{tpu_custom_call.1} parent=1 // pred_region
      %s42 = ssub.s32 512, 512
      %43 = vsyncadd [#allocation6], %s42
      %s44 = sshll.u32 [#allocation7], 4
      %s45 = int_to_ptr.vmem [resolvable:$true] %s44
      %50 = dma.hbm_to_vmem [thread:$0]  %s3, 512, %s45, [#allocation6], 128, 128, 8
    $region17: #{tpu_custom_call.1} parent=1 // pred_fallthru
      _
    // Predicated region
    $region18: #{tpu_custom_call.1} parent=1 // pred_check
      _
    $region19: #{tpu_custom_call.1} parent=1 // pred_check_branch
      %52 = sbr.rel (0) target = $region21
    $region20: #{tpu_custom_call.1} parent=1 // pred_region
      _
    $region21: #{tpu_custom_call.1} parent=1 // pred_fallthru
      _
    // Predicated region
    $region22: #{tpu_custom_call.1} parent=1 // pred_check
      _
    $region23: #{tpu_custom_call.1} parent=1 // pred_check_branch
      %54 = sbr.rel (0) target = $region25
    $region24: #{tpu_custom_call.1} parent=1 // pred_region
      %55 = dma.done [#allocation3], 256
    $region25: #{tpu_custom_call.1} parent=1 // pred_fallthru
      _
    // Predicated region
    $region26: #{tpu_custom_call.1} parent=1 // pred_check
      _
    $region27: #{tpu_custom_call.1} parent=1 // pred_check_branch
      %57 = sbr.rel (0) target = $region29
    $region28: #{tpu_custom_call.1} parent=1 // pred_region
      %58 = dma.done [#allocation6], 1536
    $region29: #{tpu_custom_call.1} parent=1 // pred_fallthru
      _
    // Predicated region
    $region30: #{tpu_custom_call.1} parent=1 // pred_check
      _
    $region31: #{tpu_custom_call.1} parent=1 // pred_check_branch
      %60 = sbr.rel (0) target = $region33
    $region32: #{tpu_custom_call.1} parent=1 // pred_region
      %61 = dma.done [#allocation6], 512
    $region33: #{tpu_custom_call.1} parent=1 // pred_fallthru
      _
    %v62 = vld [vmem:[#allocation2] sm:$0xff]
    %v63 = vld [vmem:[#allocation2 + $0x8] sm:$0xff]
    %v64 = vld [vmem:[#allocation5] sm:$0xff]
    %v65 = vld [vmem:[#allocation5 + $0x8] sm:$0xff]
    %v66 = vld [vmem:[#allocation5 + $0x10] sm:$0xff]
    %v67 = vld [vmem:[#allocation5 + $0x18] sm:$0xff]
    %v68 = vld [vmem:[#allocation5 + $0x20] sm:$0xff]
    %v69 = vld [vmem:[#allocation5 + $0x28] sm:$0xff]
    %v70 = vld [vmem:[#allocation5 + $0x30] sm:$0xff]
    %v71 = vld [vmem:[#allocation5 + $0x38] sm:$0xff]
    %v72 = vld [vmem:[#allocation5 + $0x40] sm:$0xff]
    %v73 = vld [vmem:[#allocation5 + $0x48] sm:$0xff]
    %v74 = vld [vmem:[#allocation5 + $0x50] sm:$0xff]
    %v75 = vld [vmem:[#allocation5 + $0x58] sm:$0xff]
    %v76 = vld [vmem:[%s2] sm:$0x1]
    %v78 = vlaneseq
    %v79 = vshrl.u32 %v78, 7
    %v80 = vsub.s32 0, %v79
    %v81 = vrot.slane %v76, %v80
    %vm83 = vcmask 785408
    %v85 = vsel %vm83, %v62, 0
    %v88 = vsel %vm83, %v63, 0
    %90 = vmatprep.subr.mxu0 0.0
    %91 = vmatpush1.msra.mxu0 %v64
    %92 = vmatprep.subr.mxu0 0.0
    %93 = vmatpush1.msra.mxu0 %v65
    %94 = vmatprep.subr.mxu0 0.0
    %95 = vmatpush1.msra.mxu0 %v66
    %96 = vmatprep.subr.mxu0 0.0
    %97 = vmatpush1.msra.mxu0 %v67
    %98 = vmatprep.subr.mxu0 0.0
    %99 = vmatpush1.msra.mxu0 %v68
    %100 = vmatprep.subr.mxu0 0.0
    %101 = vmatpush1.msra.mxu0 %v69
    %102 = vmatprep.subr.mxu0 0.0
    %103 = vmatpush1.msra.mxu0 %v70
    %104 = vmatprep.subr.mxu0 0.0
    %105 = vmatpush1.msra.mxu0 %v71
    %106 = vmatprep.subr.mxu0 0.0
    %107 = vmatpush1.msra.mxu0 %v72
    %108 = vmatprep.subr.mxu0 0.0
    %109 = vmatpush1.msra.mxu0 %v73
    %110 = vmatprep.subr.mxu0 0.0
    %111 = vmatpush1.msra.mxu0 %v74
    %112 = vmatprep.subr.mxu0 0.0
    %113 = vmatpush1.msra.mxu0 %v75
    %114 = vmatprep.subr.mxu0 0.0
    %115 = vmatpush1.msra.mxu0 0.0
    %116 = vmatprep.subr.mxu0 0.0
    %117 = vmatpush1.msra.mxu0 0.0
    %118 = vmatprep.subr.mxu0 0.0
    %119 = vmatpush1.msra.mxu0 0.0
    %120 = vmatprep.subr.mxu0 0.0
    %121 = vmatpush1.msra.mxu0 0.0
    %122 = vmatprep.subr.mxu0 0.0
    %123 = vmatpush1.msra.mxu0 0.0
    %124 = vmatprep.subr.mxu0 0.0
    %125 = vmatpush1.msra.mxu0 0.0
    %126 = vmatprep.subr.mxu0 0.0
    %127 = vmatpush1.msra.mxu0 0.0
    %128 = vmatprep.subr.mxu0 0.0
    %129 = vmatpush1.msra.mxu0 0.0
    %130 = vmatprep.subr.mxu0 0.0
    %131 = vmatpush1.msra.mxu0 0.0
    %132 = vmatprep.subr.mxu0 0.0
    %133 = vmatpush1.msra.mxu0 0.0
    %134 = vmatprep.subr.mxu0 0.0
    %135 = vmatpush1.msra.mxu0 0.0
    %136 = vmatprep.subr.mxu0 0.0
    %137 = vmatpush1.msra.mxu0 0.0
    %138 = vmatprep.subr.mxu0 0.0
    %139 = vmatpush1.msra.mxu0 0.0
    %140 = vmatprep.subr.mxu0 0.0
    %141 = vmatpush1.msra.mxu0 0.0
    %142 = vmatprep.subr.mxu0 0.0
    %143 = vmatpush1.msra.mxu0 0.0
    %144 = vmatprep.subr.mxu0 0.0
    %145 = vmatpush1.msra.mxu0 0.0
    %146 = vmatprep.subr.mxu0 0.0
    %147 = vmatpush1.msra.mxu0 0.0
    %148 = vmatprep.subr.mxu0 0.0
    %149 = vmatpush1.msra.mxu0 0.0
    %150 = vmatprep.subr.mxu0 0.0
    %151 = vmatpush1.msra.mxu0 0.0
    %152 = vmatprep.subr.mxu0 0.0
    %153 = vmatpush1.msra.mxu0 0.0
    %154 = vmatprep.mubr.f32.mxu0 0.0
    %155 = vmatmul.mubr.f32.gmra.mrb[0].mxu0 %v85
    %v156 = vpop.f32.mrb[0].mxu0
    %v157 = vadd.f32 %v81, %v156
    %v158 = vpop.f32.mrb[0].mxu0
    %159 = vmatprep.mubr.f32.mxu0 0.0
    %160 = vmatmul.mubr.f32.gmra.mrb[0].mxu0 %v88
    %v161 = vpop.f32.mrb[0].mxu0
    %v162 = vadd.f32 %v81, %v161
    %v163 = vpop.f32.mrb[0].mxu0
    %164 = vdwg.mxu0
    %v165 = vld [vmem:[#allocation7] sm:$0xff]
    %v166 = vld [vmem:[#allocation7 + $0x8] sm:$0xff]
    %v167 = vld [vmem:[#allocation7 + $0x10] sm:$0xff]
    %v168 = vld [vmem:[#allocation7 + $0x18] sm:$0xff]
    %v169 = vld [vmem:[%s4] sm:$0x1]
    %v171 = vlaneseq
    %v172 = vshrl.u32 %v171, 7
    %v173 = vsub.s32 0, %v172
    %v174 = vrot.slane %v169, %v173
    %177 = vrot.lane.b32.xlu0 %v157, 96
    %v178 = vpop.permute.xlu0 %177
    %vm179 = vcmask 64512
    %v180 = vsel %vm179, %v157, 0
    %v182 = vsel %vm179, %v178, 0
    %184 = vmatprep.subr.mxu0 0.0
    %185 = vmatpush1.xpose.msra.mxu0 %v182
    %186 = vmatprep.subr.mxu0 0.0
    %187 = vmatpush1.xpose.msra.mxu0 0.0
    %188 = vmatprep.subr.mxu0 0.0
    %189 = vmatpush1.xpose.msra.mxu0 0.0
    %190 = vmatprep.subr.mxu0 0.0
    %191 = vmatpush1.xpose.msra.mxu0 0.0
    %192 = vmatprep.subr.mxu0 0.0
    %193 = vmatpush1.xpose.msra.mxu0 0.0
    %194 = vmatprep.subr.mxu0 0.0
    %195 = vmatpush1.xpose.msra.mxu0 0.0
    %196 = vmatprep.subr.mxu0 0.0
    %197 = vmatpush1.xpose.msra.mxu0 0.0
    %198 = vmatprep.subr.mxu0 0.0
    %199 = vmatpush1.xpose.msra.mxu0 0.0
    %200 = vmatprep.subr.mxu0 0.0
    %201 = vmatpush1.xpose.msra.mxu0 0.0
    %202 = vmatprep.subr.mxu0 0.0
    %203 = vmatpush1.xpose.msra.mxu0 0.0
    %204 = vmatprep.subr.mxu0 0.0
    %205 = vmatpush1.xpose.msra.mxu0 0.0
    %206 = vmatprep.subr.mxu0 0.0
    %207 = vmatpush1.xpose.msra.mxu0 0.0
    %208 = vmatprep.subr.mxu0 0.0
    %209 = vmatpush1.xpose.msra.mxu0 0.0
    %210 = vmatprep.subr.mxu0 0.0
    %211 = vmatpush1.xpose.msra.mxu0 0.0
    %212 = vmatprep.subr.mxu0 0.0
    %213 = vmatpush1.xpose.msra.mxu0 0.0
    %214 = vmatprep.subr.mxu0 0.0
    %215 = vmatpush1.xpose.msra.mxu0 0.0
    %216 = vmatprep.subr.mxu0 0.0
    %217 = vmatpush1.xpose.msra.mxu0 0.0
    %218 = vmatprep.subr.mxu0 0.0
    %219 = vmatpush1.xpose.msra.mxu0 0.0
    %220 = vmatprep.subr.mxu0 0.0
    %221 = vmatpush1.xpose.msra.mxu0 0.0
    %222 = vmatprep.subr.mxu0 0.0
    %223 = vmatpush1.xpose.msra.mxu0 0.0
    %224 = vmatprep.subr.mxu0 0.0
    %225 = vmatpush1.xpose.msra.mxu0 0.0
    %226 = vmatprep.subr.mxu0 0.0
    %227 = vmatpush1.xpose.msra.mxu0 0.0
    %228 = vmatprep.subr.mxu0 0.0
    %229 = vmatpush1.xpose.msra.mxu0 0.0
    %230 = vmatprep.subr.mxu0 0.0
    %231 = vmatpush1.xpose.msra.mxu0 0.0
    %232 = vmatprep.subr.mxu0 0.0
    %233 = vmatpush1.xpose.msra.mxu0 0.0
    %234 = vmatprep.subr.mxu0 0.0
    %235 = vmatpush1.xpose.msra.mxu0 0.0
    %236 = vmatprep.subr.mxu0 0.0
    %237 = vmatpush1.xpose.msra.mxu0 0.0
    %238 = vmatprep.subr.mxu0 0.0
    %239 = vmatpush1.xpose.msra.mxu0 0.0
    %240 = vmatprep.subr.mxu0 0.0
    %241 = vmatpush1.xpose.msra.mxu0 0.0
    %242 = vmatprep.subr.mxu0 0.0
    %243 = vmatpush1.xpose.msra.mxu0 0.0
    %244 = vmatprep.subr.mxu0 0.0
    %245 = vmatpush1.xpose.msra.mxu0 0.0
    %246 = vmatprep.subr.mxu0 0.0
    %247 = vmatpush1.xpose.msra.mxu0 0.0
    %248 = vmatprep.mubr.f32.mxu0 0.0
    %249 = vmatmul.mubr.f32.gmra.mrb[0].mxu0 %v180
    %v250 = vpop.f32.mrb[0].mxu0
    %v251 = vadd.f32 0.0, %v250
    %v252 = vpop.f32.mrb[0].mxu0
    %253 = vdwg.mxu0
    %v254 = vmul.f32 %v251, 0.35355338
    %v255 = vsel %vm179, %v254, -inf
    %256 = vmax.xlane.f32.xlu0 %v255
    %v257 = vpop.xlane.xlu0 %256
    %v258 = vsub.f32 %v254, %v257
    %v259 = vmul.f32 %v258, 1.442695
    %v260 = vpow.pop %v259
    %v261 = vsel %vm179, %v260, 0.0
    %262 = vadd.xlane.f32.xlu0 %v261
    %v263 = vpop.xlane.xlu0 %262
    %v264 = vrcp.pop %v263
    %v265 = vmul.f32 %v260, %v264
    %266 = vrot.lane.b32.xlu0 %v157, 64
    %v267 = vpop.permute.xlu0 %266
    %v270 = vsel %vm179, %v265, 0
    %272 = vmatprep.subr.mxu0 0.0
    %273 = vmatpush1.msra.mxu0 %v267
    %274 = vmatprep.subr.mxu0 0.0
    %275 = vmatpush1.msra.mxu0 0.0
    %276 = vmatprep.subr.mxu0 0.0
    %277 = vmatpush1.msra.mxu0 0.0
    %278 = vmatprep.subr.mxu0 0.0
    %279 = vmatpush1.msra.mxu0 0.0
    %280 = vmatprep.subr.mxu0 0.0
    %281 = vmatpush1.msra.mxu0 0.0
    %282 = vmatprep.subr.mxu0 0.0
    %283 = vmatpush1.msra.mxu0 0.0
    %284 = vmatprep.subr.mxu0 0.0
    %285 = vmatpush1.msra.mxu0 0.0
    %286 = vmatprep.subr.mxu0 0.0
    %287 = vmatpush1.msra.mxu0 0.0
    %288 = vmatprep.subr.mxu0 0.0
    %289 = vmatpush1.msra.mxu0 0.0
    %290 = vmatprep.subr.mxu0 0.0
    %291 = vmatpush1.msra.mxu0 0.0
    %292 = vmatprep.subr.mxu0 0.0
    %293 = vmatpush1.msra.mxu0 0.0
    %294 = vmatprep.subr.mxu0 0.0
    %295 = vmatpush1.msra.mxu0 0.0
    %296 = vmatprep.subr.mxu0 0.0
    %297 = vmatpush1.msra.mxu0 0.0
    %298 = vmatprep.subr.mxu0 0.0
    %299 = vmatpush1.msra.mxu0 0.0
    %300 = vmatprep.subr.mxu0 0.0
    %301 = vmatpush1.msra.mxu0 0.0
    %302 = vmatprep.subr.mxu0 0.0
    %303 = vmatpush1.msra.mxu0 0.0
    %304 = vmatprep.subr.mxu0 0.0
    %305 = vmatpush1.msra.mxu0 0.0
    %306 = vmatprep.subr.mxu0 0.0
    %307 = vmatpush1.msra.mxu0 0.0
    %308 = vmatprep.subr.mxu0 0.0
    %309 = vmatpush1.msra.mxu0 0.0
    %310 = vmatprep.subr.mxu0 0.0
    %311 = vmatpush1.msra.mxu0 0.0
    %312 = vmatprep.subr.mxu0 0.0
    %313 = vmatpush1.msra.mxu0 0.0
    %314 = vmatprep.subr.mxu0 0.0
    %315 = vmatpush1.msra.mxu0 0.0
    %316 = vmatprep.subr.mxu0 0.0
    %317 = vmatpush1.msra.mxu0 0.0
    %318 = vmatprep.subr.mxu0 0.0
    %319 = vmatpush1.msra.mxu0 0.0
    %320 = vmatprep.subr.mxu0 0.0
    %321 = vmatpush1.msra.mxu0 0.0
    %322 = vmatprep.subr.mxu0 0.0
    %323 = vmatpush1.msra.mxu0 0.0
    %324 = vmatprep.subr.mxu0 0.0
    %325 = vmatpush1.msra.mxu0 0.0
    %326 = vmatprep.subr.mxu0 0.0
    %327 = vmatpush1.msra.mxu0 0.0
    %328 = vmatprep.subr.mxu0 0.0
    %329 = vmatpush1.msra.mxu0 0.0
    %330 = vmatprep.subr.mxu0 0.0
    %331 = vmatpush1.msra.mxu0 0.0
    %332 = vmatprep.subr.mxu0 0.0
    %333 = vmatpush1.msra.mxu0 0.0
    %334 = vmatprep.subr.mxu0 0.0
    %335 = vmatpush1.msra.mxu0 0.0
    %336 = vmatprep.mubr.f32.mxu0 0.0
    %337 = vmatmul.mubr.f32.gmra.mrb[0].mxu0 %v270
    %v338 = vpop.f32.mrb[0].mxu0
    %v339 = vadd.f32 0.0, %v338
    %v340 = vpop.f32.mrb[0].mxu0
    %341 = vdwg.mxu0
    %v343 = vsel %vm179, %v339, 0
    %345 = vmatprep.subr.mxu0 0.0
    %346 = vmatpush1.msra.mxu0 %v165
    %347 = vmatprep.subr.mxu0 0.0
    %348 = vmatpush1.msra.mxu0 0.0
    %349 = vmatprep.subr.mxu0 0.0
    %350 = vmatpush1.msra.mxu0 0.0
    %351 = vmatprep.subr.mxu0 0.0
    %352 = vmatpush1.msra.mxu0 0.0
    %353 = vmatprep.subr.mxu0 0.0
    %354 = vmatpush1.msra.mxu0 0.0
    %355 = vmatprep.subr.mxu0 0.0
    %356 = vmatpush1.msra.mxu0 0.0
    %357 = vmatprep.subr.mxu0 0.0
    %358 = vmatpush1.msra.mxu0 0.0
    %359 = vmatprep.subr.mxu0 0.0
    %360 = vmatpush1.msra.mxu0 0.0
    %361 = vmatprep.subr.mxu0 0.0
    %362 = vmatpush1.msra.mxu0 0.0
    %363 = vmatprep.subr.mxu0 0.0
    %364 = vmatpush1.msra.mxu0 0.0
    %365 = vmatprep.subr.mxu0 0.0
    %366 = vmatpush1.msra.mxu0 0.0
    %367 = vmatprep.subr.mxu0 0.0
    %368 = vmatpush1.msra.mxu0 0.0
    %369 = vmatprep.subr.mxu0 0.0
    %370 = vmatpush1.msra.mxu0 0.0
    %371 = vmatprep.subr.mxu0 0.0
    %372 = vmatpush1.msra.mxu0 0.0
    %373 = vmatprep.subr.mxu0 0.0
    %374 = vmatpush1.msra.mxu0 0.0
    %375 = vmatprep.subr.mxu0 0.0
    %376 = vmatpush1.msra.mxu0 0.0
    %377 = vmatprep.subr.mxu0 0.0
    %378 = vmatpush1.msra.mxu0 0.0
    %379 = vmatprep.subr.mxu0 0.0
    %380 = vmatpush1.msra.mxu0 0.0
    %381 = vmatprep.subr.mxu0 0.0
    %382 = vmatpush1.msra.mxu0 0.0
    %383 = vmatprep.subr.mxu0 0.0
    %384 = vmatpush1.msra.mxu0 0.0
    %385 = vmatprep.subr.mxu0 0.0
    %386 = vmatpush1.msra.mxu0 0.0
    %387 = vmatprep.subr.mxu0 0.0
    %388 = vmatpush1.msra.mxu0 0.0
    %389 = vmatprep.subr.mxu0 0.0
    %390 = vmatpush1.msra.mxu0 0.0
    %391 = vmatprep.subr.mxu0 0.0
    %392 = vmatpush1.msra.mxu0 0.0
    %393 = vmatprep.subr.mxu0 0.0
    %394 = vmatpush1.msra.mxu0 0.0
    %395 = vmatprep.subr.mxu0 0.0
    %396 = vmatpush1.msra.mxu0 0.0
    %397 = vmatprep.subr.mxu0 0.0
    %398 = vmatpush1.msra.mxu0 0.0
    %399 = vmatprep.subr.mxu0 0.0
    %400 = vmatpush1.msra.mxu0 0.0
    %401 = vmatprep.subr.mxu0 0.0
    %402 = vmatpush1.msra.mxu0 0.0
    %403 = vmatprep.subr.mxu0 0.0
    %404 = vmatpush1.msra.mxu0 0.0
    %405 = vmatprep.subr.mxu0 0.0
    %406 = vmatpush1.msra.mxu0 0.0
    %407 = vmatprep.subr.mxu0 0.0
    %408 = vmatpush1.msra.mxu0 0.0
    %409 = vmatprep.mubr.f32.mxu0 0.0
    %410 = vmatmul.mubr.f32.gmra.mrb[0].mxu0 %v343
    %v411 = vpop.f32.mrb[0].mxu0
    %v412 = vadd.f32 0.0, %v411
    %v413 = vpop.f32.mrb[0].mxu0
    %414 = vdwg.mxu0
    %v415 = vadd.f32 %v174, %v412
    %416 = vrot.lane.b32.xlu0 %v157, 120
    %v417 = vpop.permute.xlu0 %416
    %418 = vrot.lane.b32.xlu0 %v157, 88
    %v419 = vpop.permute.xlu0 %418
    %v420 = vsel %vm179, %v417, 0
    %v422 = vsel %vm179, %v419, 0
    %424 = vmatprep.subr.mxu0 0.0
    %425 = vmatpush1.xpose.msra.mxu0 %v422
    %426 = vmatprep.subr.mxu0 0.0
    %427 = vmatpush1.xpose.msra.mxu0 0.0
    %428 = vmatprep.subr.mxu0 0.0
    %429 = vmatpush1.xpose.msra.mxu0 0.0
    %430 = vmatprep.subr.mxu0 0.0
    %431 = vmatpush1.xpose.msra.mxu0 0.0
    %432 = vmatprep.subr.mxu0 0.0
    %433 = vmatpush1.xpose.msra.mxu0 0.0
    %434 = vmatprep.subr.mxu0 0.0
    %435 = vmatpush1.xpose.msra.mxu0 0.0
    %436 = vmatprep.subr.mxu0 0.0
    %437 = vmatpush1.xpose.msra.mxu0 0.0
    %438 = vmatprep.subr.mxu0 0.0
    %439 = vmatpush1.xpose.msra.mxu0 0.0
    %440 = vmatprep.subr.mxu0 0.0
    %441 = vmatpush1.xpose.msra.mxu0 0.0
    %442 = vmatprep.subr.mxu0 0.0
    %443 = vmatpush1.xpose.msra.mxu0 0.0
    %444 = vmatprep.subr.mxu0 0.0
    %445 = vmatpush1.xpose.msra.mxu0 0.0
    %446 = vmatprep.subr.mxu0 0.0
    %447 = vmatpush1.xpose.msra.mxu0 0.0
    %448 = vmatprep.subr.mxu0 0.0
    %449 = vmatpush1.xpose.msra.mxu0 0.0
    %450 = vmatprep.subr.mxu0 0.0
    %451 = vmatpush1.xpose.msra.mxu0 0.0
    %452 = vmatprep.subr.mxu0 0.0
    %453 = vmatpush1.xpose.msra.mxu0 0.0
    %454 = vmatprep.subr.mxu0 0.0
    %455 = vmatpush1.xpose.msra.mxu0 0.0
    %456 = vmatprep.subr.mxu0 0.0
    %457 = vmatpush1.xpose.msra.mxu0 0.0
    %458 = vmatprep.subr.mxu0 0.0
    %459 = vmatpush1.xpose.msra.mxu0 0.0
    %460 = vmatprep.subr.mxu0 0.0
    %461 = vmatpush1.xpose.msra.mxu0 0.0
    %462 = vmatprep.subr.mxu0 0.0
    %463 = vmatpush1.xpose.msra.mxu0 0.0
    %464 = vmatprep.subr.mxu0 0.0
    %465 = vmatpush1.xpose.msra.mxu0 0.0
    %466 = vmatprep.subr.mxu0 0.0
    %467 = vmatpush1.xpose.msra.mxu0 0.0
    %468 = vmatprep.subr.mxu0 0.0
    %469 = vmatpush1.xpose.msra.mxu0 0.0
    %470 = vmatprep.subr.mxu0 0.0
    %471 = vmatpush1.xpose.msra.mxu0 0.0
    %472 = vmatprep.subr.mxu0 0.0
    %473 = vmatpush1.xpose.msra.mxu0 0.0
    %474 = vmatprep.subr.mxu0 0.0
    %475 = vmatpush1.xpose.msra.mxu0 0.0
    %476 = vmatprep.subr.mxu0 0.0
    %477 = vmatpush1.xpose.msra.mxu0 0.0
    %478 = vmatprep.subr.mxu0 0.0
    %479 = vmatpush1.xpose.msra.mxu0 0.0
    %480 = vmatprep.subr.mxu0 0.0
    %481 = vmatpush1.xpose.msra.mxu0 0.0
    %482 = vmatprep.subr.mxu0 0.0
    %483 = vmatpush1.xpose.msra.mxu0 0.0
    %484 = vmatprep.subr.mxu0 0.0
    %485 = vmatpush1.xpose.msra.mxu0 0.0
    %486 = vmatprep.subr.mxu0 0.0
    %487 = vmatpush1.xpose.msra.mxu0 0.0
    %488 = vmatprep.mubr.f32.mxu0 0.0
    %489 = vmatmul.mubr.f32.gmra.mrb[0].mxu0 %v420
    %v490 = vpop.f32.mrb[0].mxu0
    %v491 = vadd.f32 0.0, %v490
    %v492 = vpop.f32.mrb[0].mxu0
    %493 = vdwg.mxu0
    %v494 = vmul.f32 %v491, 0.35355338
    %v495 = vsel %vm179, %v494, -inf
    %496 = vmax.xlane.f32.xlu0 %v495
    %v497 = vpop.xlane.xlu0 %496
    %v498 = vsub.f32 %v494, %v497
    %v499 = vmul.f32 %v498, 1.442695
    %v500 = vpow.pop %v499
    %v501 = vsel %vm179, %v500, 0.0
    %502 = vadd.xlane.f32.xlu0 %v501
    %v503 = vpop.xlane.xlu0 %502
    %v504 = vrcp.pop %v503
    %v505 = vmul.f32 %v500, %v504
    %506 = vrot.lane.b32.xlu0 %v157, 56
    %v507 = vpop.permute.xlu0 %506
    %v510 = vsel %vm179, %v505, 0
    %512 = vmatprep.subr.mxu0 0.0
    %513 = vmatpush1.msra.mxu0 %v507
    %514 = vmatprep.subr.mxu0 0.0
    %515 = vmatpush1.msra.mxu0 0.0
    %516 = vmatprep.subr.mxu0 0.0
    %517 = vmatpush1.msra.mxu0 0.0
    %518 = vmatprep.subr.mxu0 0.0
    %519 = vmatpush1.msra.mxu0 0.0
    %520 = vmatprep.subr.mxu0 0.0
    %521 = vmatpush1.msra.mxu0 0.0
    %522 = vmatprep.subr.mxu0 0.0
    %523 = vmatpush1.msra.mxu0 0.0
    %524 = vmatprep.subr.mxu0 0.0
    %525 = vmatpush1.msra.mxu0 0.0
    %526 = vmatprep.subr.mxu0 0.0
    %527 = vmatpush1.msra.mxu0 0.0
    %528 = vmatprep.subr.mxu0 0.0
    %529 = vmatpush1.msra.mxu0 0.0
    %530 = vmatprep.subr.mxu0 0.0
    %531 = vmatpush1.msra.mxu0 0.0
    %532 = vmatprep.subr.mxu0 0.0
    %533 = vmatpush1.msra.mxu0 0.0
    %534 = vmatprep.subr.mxu0 0.0
    %535 = vmatpush1.msra.mxu0 0.0
    %536 = vmatprep.subr.mxu0 0.0
    %537 = vmatpush1.msra.mxu0 0.0
    %538 = vmatprep.subr.mxu0 0.0
    %539 = vmatpush1.msra.mxu0 0.0
    %540 = vmatprep.subr.mxu0 0.0
    %541 = vmatpush1.msra.mxu0 0.0
    %542 = vmatprep.subr.mxu0 0.0
    %543 = vmatpush1.msra.mxu0 0.0
    %544 = vmatprep.subr.mxu0 0.0
    %545 = vmatpush1.msra.mxu0 0.0
    %546 = vmatprep.subr.mxu0 0.0
    %547 = vmatpush1.msra.mxu0 0.0
    %548 = vmatprep.subr.mxu0 0.0
    %549 = vmatpush1.msra.mxu0 0.0
    %550 = vmatprep.subr.mxu0 0.0
    %551 = vmatpush1.msra.mxu0 0.0
    %552 = vmatprep.subr.mxu0 0.0
    %553 = vmatpush1.msra.mxu0 0.0
    %554 = vmatprep.subr.mxu0 0.0
    %555 = vmatpush1.msra.mxu0 0.0
    %556 = vmatprep.subr.mxu0 0.0
    %557 = vmatpush1.msra.mxu0 0.0
    %558 = vmatprep.subr.mxu0 0.0
    %559 = vmatpush1.msra.mxu0 0.0
    %560 = vmatprep.subr.mxu0 0.0
    %561 = vmatpush1.msra.mxu0 0.0
    %562 = vmatprep.subr.mxu0 0.0
    %563 = vmatpush1.msra.mxu0 0.0
    %564 = vmatprep.subr.mxu0 0.0
    %565 = vmatpush1.msra.mxu0 0.0
    %566 = vmatprep.subr.mxu0 0.0
    %567 = vmatpush1.msra.mxu0 0.0
    %568 = vmatprep.subr.mxu0 0.0
    %569 = vmatpush1.msra.mxu0 0.0
    %570 = vmatprep.subr.mxu0 0.0
    %571 = vmatpush1.msra.mxu0 0.0
    %572 = vmatprep.subr.mxu0 0.0
    %573 = vmatpush1.msra.mxu0 0.0
    %574 = vmatprep.subr.mxu0 0.0
    %575 = vmatpush1.msra.mxu0 0.0
    %576 = vmatprep.mubr.f32.mxu0 0.0
    %577 = vmatmul.mubr.f32.gmra.mrb[0].mxu0 %v510
    %v578 = vpop.f32.mrb[0].mxu0
    %v579 = vadd.f32 0.0, %v578
    %v580 = vpop.f32.mrb[0].mxu0
    %581 = vdwg.mxu0
    %v583 = vsel %vm179, %v579, 0
    %585 = vmatprep.subr.mxu0 0.0
    %586 = vmatpush1.msra.mxu0 %v166
    %587 = vmatprep.subr.mxu0 0.0
    %588 = vmatpush1.msra.mxu0 0.0
    %589 = vmatprep.subr.mxu0 0.0
    %590 = vmatpush1.msra.mxu0 0.0
    %591 = vmatprep.subr.mxu0 0.0
    %592 = vmatpush1.msra.mxu0 0.0
    %593 = vmatprep.subr.mxu0 0.0
    %594 = vmatpush1.msra.mxu0 0.0
    %595 = vmatprep.subr.mxu0 0.0
    %596 = vmatpush1.msra.mxu0 0.0
    %597 = vmatprep.subr.mxu0 0.0
    %598 = vmatpush1.msra.mxu0 0.0
    %599 = vmatprep.subr.mxu0 0.0
    %600 = vmatpush1.msra.mxu0 0.0
    %601 = vmatprep.subr.mxu0 0.0
    %602 = vmatpush1.msra.mxu0 0.0
    %603 = vmatprep.subr.mxu0 0.0
    %604 = vmatpush1.msra.mxu0 0.0
    %605 = vmatprep.subr.mxu0 0.0
    %606 = vmatpush1.msra.mxu0 0.0
    %607 = vmatprep.subr.mxu0 0.0
    %608 = vmatpush1.msra.mxu0 0.0
    %609 = vmatprep.subr.mxu0 0.0
    %610 = vmatpush1.msra.mxu0 0.0
    %611 = vmatprep.subr.mxu0 0.0
    %612 = vmatpush1.msra.mxu0 0.0
    %613 = vmatprep.subr.mxu0 0.0
    %614 = vmatpush1.msra.mxu0 0.0
    %615 = vmatprep.subr.mxu0 0.0
    %616 = vmatpush1.msra.mxu0 0.0
    %617 = vmatprep.subr.mxu0 0.0
    %618 = vmatpush1.msra.mxu0 0.0
    %619 = vmatprep.subr.mxu0 0.0
    %620 = vmatpush1.msra.mxu0 0.0
    %621 = vmatprep.subr.mxu0 0.0
    %622 = vmatpush1.msra.mxu0 0.0
    %623 = vmatprep.subr.mxu0 0.0
    %624 = vmatpush1.msra.mxu0 0.0
    %625 = vmatprep.subr.mxu0 0.0
    %626 = vmatpush1.msra.mxu0 0.0
    %627 = vmatprep.subr.mxu0 0.0
    %628 = vmatpush1.msra.mxu0 0.0
    %629 = vmatprep.subr.mxu0 0.0
    %630 = vmatpush1.msra.mxu0 0.0
    %631 = vmatprep.subr.mxu0 0.0
    %632 = vmatpush1.msra.mxu0 0.0
    %633 = vmatprep.subr.mxu0 0.0
    %634 = vmatpush1.msra.mxu0 0.0
    %635 = vmatprep.subr.mxu0 0.0
    %636 = vmatpush1.msra.mxu0 0.0
    %637 = vmatprep.subr.mxu0 0.0
    %638 = vmatpush1.msra.mxu0 0.0
    %639 = vmatprep.subr.mxu0 0.0
    %640 = vmatpush1.msra.mxu0 0.0
    %641 = vmatprep.subr.mxu0 0.0
    %642 = vmatpush1.msra.mxu0 0.0
    %643 = vmatprep.subr.mxu0 0.0
    %644 = vmatpush1.msra.mxu0 0.0
    %645 = vmatprep.subr.mxu0 0.0
    %646 = vmatpush1.msra.mxu0 0.0
    %647 = vmatprep.subr.mxu0 0.0
    %648 = vmatpush1.msra.mxu0 0.0
    %649 = vmatprep.mubr.f32.mxu0 0.0
    %650 = vmatmul.mubr.f32.gmra.mrb[0].mxu0 %v583
    %v651 = vpop.f32.mrb[0].mxu0
    %v652 = vadd.f32 0.0, %v651
    %v653 = vpop.f32.mrb[0].mxu0
    %654 = vdwg.mxu0
    %v655 = vadd.f32 %v415, %v652
    %656 = vrot.lane.b32.xlu0 %v157, 112
    %v657 = vpop.permute.xlu0 %656
    %658 = vrot.lane.b32.xlu0 %v157, 80
    %v659 = vpop.permute.xlu0 %658
    %v660 = vsel %vm179, %v657, 0
    %v662 = vsel %vm179, %v659, 0
    %664 = vmatprep.subr.mxu0 0.0
    %665 = vmatpush1.xpose.msra.mxu0 %v662
    %666 = vmatprep.subr.mxu0 0.0
    %667 = vmatpush1.xpose.msra.mxu0 0.0
    %668 = vmatprep.subr.mxu0 0.0
    %669 = vmatpush1.xpose.msra.mxu0 0.0
    %670 = vmatprep.subr.mxu0 0.0
    %671 = vmatpush1.xpose.msra.mxu0 0.0
    %672 = vmatprep.subr.mxu0 0.0
    %673 = vmatpush1.xpose.msra.mxu0 0.0
    %674 = vmatprep.subr.mxu0 0.0
    %675 = vmatpush1.xpose.msra.mxu0 0.0
    %676 = vmatprep.subr.mxu0 0.0
    %677 = vmatpush1.xpose.msra.mxu0 0.0
    %678 = vmatprep.subr.mxu0 0.0
    %679 = vmatpush1.xpose.msra.mxu0 0.0
    %680 = vmatprep.subr.mxu0 0.0
    %681 = vmatpush1.xpose.msra.mxu0 0.0
    %682 = vmatprep.subr.mxu0 0.0
    %683 = vmatpush1.xpose.msra.mxu0 0.0
    %684 = vmatprep.subr.mxu0 0.0
    %685 = vmatpush1.xpose.msra.mxu0 0.0
    %686 = vmatprep.subr.mxu0 0.0
    %687 = vmatpush1.xpose.msra.mxu0 0.0
    %688 = vmatprep.subr.mxu0 0.0
    %689 = vmatpush1.xpose.msra.mxu0 0.0
    %690 = vmatprep.subr.mxu0 0.0
    %691 = vmatpush1.xpose.msra.mxu0 0.0
    %692 = vmatprep.subr.mxu0 0.0
    %693 = vmatpush1.xpose.msra.mxu0 0.0
    %694 = vmatprep.subr.mxu0 0.0
    %695 = vmatpush1.xpose.msra.mxu0 0.0
    %696 = vmatprep.subr.mxu0 0.0
    %697 = vmatpush1.xpose.msra.mxu0 0.0
    %698 = vmatprep.subr.mxu0 0.0
    %699 = vmatpush1.xpose.msra.mxu0 0.0
    %700 = vmatprep.subr.mxu0 0.0
    %701 = vmatpush1.xpose.msra.mxu0 0.0
    %702 = vmatprep.subr.mxu0 0.0
    %703 = vmatpush1.xpose.msra.mxu0 0.0
    %704 = vmatprep.subr.mxu0 0.0
    %705 = vmatpush1.xpose.msra.mxu0 0.0
    %706 = vmatprep.subr.mxu0 0.0
    %707 = vmatpush1.xpose.msra.mxu0 0.0
    %708 = vmatprep.subr.mxu0 0.0
    %709 = vmatpush1.xpose.msra.mxu0 0.0
    %710 = vmatprep.subr.mxu0 0.0
    %711 = vmatpush1.xpose.msra.mxu0 0.0
    %712 = vmatprep.subr.mxu0 0.0
    %713 = vmatpush1.xpose.msra.mxu0 0.0
    %714 = vmatprep.subr.mxu0 0.0
    %715 = vmatpush1.xpose.msra.mxu0 0.0
    %716 = vmatprep.subr.mxu0 0.0
    %717 = vmatpush1.xpose.msra.mxu0 0.0
    %718 = vmatprep.subr.mxu0 0.0
    %719 = vmatpush1.xpose.msra.mxu0 0.0
    %720 = vmatprep.subr.mxu0 0.0
    %721 = vmatpush1.xpose.msra.mxu0 0.0
    %722 = vmatprep.subr.mxu0 0.0
    %723 = vmatpush1.xpose.msra.mxu0 0.0
    %724 = vmatprep.subr.mxu0 0.0
    %725 = vmatpush1.xpose.msra.mxu0 0.0
    %726 = vmatprep.subr.mxu0 0.0
    %727 = vmatpush1.xpose.msra.mxu0 0.0
    %728 = vmatprep.mubr.f32.mxu0 0.0
    %729 = vmatmul.mubr.f32.gmra.mrb[0].mxu0 %v660
    %v730 = vpop.f32.mrb[0].mxu0
    %v731 = vadd.f32 0.0, %v730
    %v732 = vpop.f32.mrb[0].mxu0
    %733 = vdwg.mxu0
    %v734 = vmul.f32 %v731, 0.35355338
    %v735 = vsel %vm179, %v734, -inf
    %736 = vmax.xlane.f32.xlu0 %v735
    %v737 = vpop.xlane.xlu0 %736
    %v738 = vsub.f32 %v734, %v737
    %v739 = vmul.f32 %v738, 1.442695
    %v740 = vpow.pop %v739
    %v741 = vsel %vm179, %v740, 0.0
    %742 = vadd.xlane.f32.xlu0 %v741
    %v743 = vpop.xlane.xlu0 %742
    %v744 = vrcp.pop %v743
    %v745 = vmul.f32 %v740, %v744
    %746 = vrot.lane.b32.xlu0 %v157, 48
    %v747 = vpop.permute.xlu0 %746
    %v750 = vsel %vm179, %v745, 0
    %752 = vmatprep.subr.mxu0 0.0
    %753 = vmatpush1.msra.mxu0 %v747
    %754 = vmatprep.subr.mxu0 0.0
    %755 = vmatpush1.msra.mxu0 0.0
    %756 = vmatprep.subr.mxu0 0.0
    %757 = vmatpush1.msra.mxu0 0.0
    %758 = vmatprep.subr.mxu0 0.0
    %759 = vmatpush1.msra.mxu0 0.0
    %760 = vmatprep.subr.mxu0 0.0
    %761 = vmatpush1.msra.mxu0 0.0
    %762 = vmatprep.subr.mxu0 0.0
    %763 = vmatpush1.msra.mxu0 0.0
    %764 = vmatprep.subr.mxu0 0.0
    %765 = vmatpush1.msra.mxu0 0.0
    %766 = vmatprep.subr.mxu0 0.0
    %767 = vmatpush1.msra.mxu0 0.0
    %768 = vmatprep.subr.mxu0 0.0
    %769 = vmatpush1.msra.mxu0 0.0
    %770 = vmatprep.subr.mxu0 0.0
    %771 = vmatpush1.msra.mxu0 0.0
    %772 = vmatprep.subr.mxu0 0.0
    %773 = vmatpush1.msra.mxu0 0.0
    %774 = vmatprep.subr.mxu0 0.0
    %775 = vmatpush1.msra.mxu0 0.0
    %776 = vmatprep.subr.mxu0 0.0
    %777 = vmatpush1.msra.mxu0 0.0
    %778 = vmatprep.subr.mxu0 0.0
    %779 = vmatpush1.msra.mxu0 0.0
    %780 = vmatprep.subr.mxu0 0.0
    %781 = vmatpush1.msra.mxu0 0.0
    %782 = vmatprep.subr.mxu0 0.0
    %783 = vmatpush1.msra.mxu0 0.0
    %784 = vmatprep.subr.mxu0 0.0
    %785 = vmatpush1.msra.mxu0 0.0
    %786 = vmatprep.subr.mxu0 0.0
    %787 = vmatpush1.msra.mxu0 0.0
    %788 = vmatprep.subr.mxu0 0.0
    %789 = vmatpush1.msra.mxu0 0.0
    %790 = vmatprep.subr.mxu0 0.0
    %791 = vmatpush1.msra.mxu0 0.0
    %792 = vmatprep.subr.mxu0 0.0
    %793 = vmatpush1.msra.mxu0 0.0
    %794 = vmatprep.subr.mxu0 0.0
    %795 = vmatpush1.msra.mxu0 0.0
    %796 = vmatprep.subr.mxu0 0.0
    %797 = vmatpush1.msra.mxu0 0.0
    %798 = vmatprep.subr.mxu0 0.0
    %799 = vmatpush1.msra.mxu0 0.0
    %800 = vmatprep.subr.mxu0 0.0
    %801 = vmatpush1.msra.mxu0 0.0
    %802 = vmatprep.subr.mxu0 0.0
    %803 = vmatpush1.msra.mxu0 0.0
    %804 = vmatprep.subr.mxu0 0.0
    %805 = vmatpush1.msra.mxu0 0.0
    %806 = vmatprep.subr.mxu0 0.0
    %807 = vmatpush1.msra.mxu0 0.0
    %808 = vmatprep.subr.mxu0 0.0
    %809 = vmatpush1.msra.mxu0 0.0
    %810 = vmatprep.subr.mxu0 0.0
    %811 = vmatpush1.msra.mxu0 0.0
    %812 = vmatprep.subr.mxu0 0.0
    %813 = vmatpush1.msra.mxu0 0.0
    %814 = vmatprep.subr.mxu0 0.0
    %815 = vmatpush1.msra.mxu0 0.0
    %816 = vmatprep.mubr.f32.mxu0 0.0
    %817 = vmatmul.mubr.f32.gmra.mrb[0].mxu0 %v750
    %v818 = vpop.f32.mrb[0].mxu0
    %v819 = vadd.f32 0.0, %v818
    %v820 = vpop.f32.mrb[0].mxu0
    %821 = vdwg.mxu0
    %v823 = vsel %vm179, %v819, 0
    %825 = vmatprep.subr.mxu0 0.0
    %826 = vmatpush1.msra.mxu0 %v167
    %827 = vmatprep.subr.mxu0 0.0
    %828 = vmatpush1.msra.mxu0 0.0
    %829 = vmatprep.subr.mxu0 0.0
    %830 = vmatpush1.msra.mxu0 0.0
    %831 = vmatprep.subr.mxu0 0.0
    %832 = vmatpush1.msra.mxu0 0.0
    %833 = vmatprep.subr.mxu0 0.0
    %834 = vmatpush1.msra.mxu0 0.0
    %835 = vmatprep.subr.mxu0 0.0
    %836 = vmatpush1.msra.mxu0 0.0
    %837 = vmatprep.subr.mxu0 0.0
    %838 = vmatpush1.msra.mxu0 0.0
    %839 = vmatprep.subr.mxu0 0.0
    %840 = vmatpush1.msra.mxu0 0.0
    %841 = vmatprep.subr.mxu0 0.0
    %842 = vmatpush1.msra.mxu0 0.0
    %843 = vmatprep.subr.mxu0 0.0
    %844 = vmatpush1.msra.mxu0 0.0
    %845 = vmatprep.subr.mxu0 0.0
    %846 = vmatpush1.msra.mxu0 0.0
    %847 = vmatprep.subr.mxu0 0.0
    %848 = vmatpush1.msra.mxu0 0.0
    %849 = vmatprep.subr.mxu0 0.0
    %850 = vmatpush1.msra.mxu0 0.0
    %851 = vmatprep.subr.mxu0 0.0
    %852 = vmatpush1.msra.mxu0 0.0
    %853 = vmatprep.subr.mxu0 0.0
    %854 = vmatpush1.msra.mxu0 0.0
    %855 = vmatprep.subr.mxu0 0.0
    %856 = vmatpush1.msra.mxu0 0.0
    %857 = vmatprep.subr.mxu0 0.0
    %858 = vmatpush1.msra.mxu0 0.0
    %859 = vmatprep.subr.mxu0 0.0
    %860 = vmatpush1.msra.mxu0 0.0
    %861 = vmatprep.subr.mxu0 0.0
    %862 = vmatpush1.msra.mxu0 0.0
    %863 = vmatprep.subr.mxu0 0.0
    %864 = vmatpush1.msra.mxu0 0.0
    %865 = vmatprep.subr.mxu0 0.0
    %866 = vmatpush1.msra.mxu0 0.0
    %867 = vmatprep.subr.mxu0 0.0
    %868 = vmatpush1.msra.mxu0 0.0
    %869 = vmatprep.subr.mxu0 0.0
    %870 = vmatpush1.msra.mxu0 0.0
    %871 = vmatprep.subr.mxu0 0.0
    %872 = vmatpush1.msra.mxu0 0.0
    %873 = vmatprep.subr.mxu0 0.0
    %874 = vmatpush1.msra.mxu0 0.0
    %875 = vmatprep.subr.mxu0 0.0
    %876 = vmatpush1.msra.mxu0 0.0
    %877 = vmatprep.subr.mxu0 0.0
    %878 = vmatpush1.msra.mxu0 0.0
    %879 = vmatprep.subr.mxu0 0.0
    %880 = vmatpush1.msra.mxu0 0.0
    %881 = vmatprep.subr.mxu0 0.0
    %882 = vmatpush1.msra.mxu0 0.0
    %883 = vmatprep.subr.mxu0 0.0
    %884 = vmatpush1.msra.mxu0 0.0
    %885 = vmatprep.subr.mxu0 0.0
    %886 = vmatpush1.msra.mxu0 0.0
    %887 = vmatprep.subr.mxu0 0.0
    %888 = vmatpush1.msra.mxu0 0.0
    %889 = vmatprep.mubr.f32.mxu0 0.0
    %890 = vmatmul.mubr.f32.gmra.mrb[0].mxu0 %v823
    %v891 = vpop.f32.mrb[0].mxu0
    %v892 = vadd.f32 0.0, %v891
    %v893 = vpop.f32.mrb[0].mxu0
    %894 = vdwg.mxu0
    %v895 = vadd.f32 %v655, %v892
    %896 = vrot.lane.b32.xlu0 %v157, 104
    %v897 = vpop.permute.xlu0 %896
    %898 = vrot.lane.b32.xlu0 %v157, 72
    %v899 = vpop.permute.xlu0 %898
    %v900 = vsel %vm179, %v897, 0
    %v902 = vsel %vm179, %v899, 0
    %904 = vmatprep.subr.mxu0 0.0
    %905 = vmatpush1.xpose.msra.mxu0 %v902
    %906 = vmatprep.subr.mxu0 0.0
    %907 = vmatpush1.xpose.msra.mxu0 0.0
    %908 = vmatprep.subr.mxu0 0.0
    %909 = vmatpush1.xpose.msra.mxu0 0.0
    %910 = vmatprep.subr.mxu0 0.0
    %911 = vmatpush1.xpose.msra.mxu0 0.0
    %912 = vmatprep.subr.mxu0 0.0
    %913 = vmatpush1.xpose.msra.mxu0 0.0
    %914 = vmatprep.subr.mxu0 0.0
    %915 = vmatpush1.xpose.msra.mxu0 0.0
    %916 = vmatprep.subr.mxu0 0.0
    %917 = vmatpush1.xpose.msra.mxu0 0.0
    %918 = vmatprep.subr.mxu0 0.0
    %919 = vmatpush1.xpose.msra.mxu0 0.0
    %920 = vmatprep.subr.mxu0 0.0
    %921 = vmatpush1.xpose.msra.mxu0 0.0
    %922 = vmatprep.subr.mxu0 0.0
    %923 = vmatpush1.xpose.msra.mxu0 0.0
    %924 = vmatprep.subr.mxu0 0.0
    %925 = vmatpush1.xpose.msra.mxu0 0.0
    %926 = vmatprep.subr.mxu0 0.0
    %927 = vmatpush1.xpose.msra.mxu0 0.0
    %928 = vmatprep.subr.mxu0 0.0
    %929 = vmatpush1.xpose.msra.mxu0 0.0
    %930 = vmatprep.subr.mxu0 0.0
    %931 = vmatpush1.xpose.msra.mxu0 0.0
    %932 = vmatprep.subr.mxu0 0.0
    %933 = vmatpush1.xpose.msra.mxu0 0.0
    %934 = vmatprep.subr.mxu0 0.0
    %935 = vmatpush1.xpose.msra.mxu0 0.0
    %936 = vmatprep.subr.mxu0 0.0
    %937 = vmatpush1.xpose.msra.mxu0 0.0
    %938 = vmatprep.subr.mxu0 0.0
    %939 = vmatpush1.xpose.msra.mxu0 0.0
    %940 = vmatprep.subr.mxu0 0.0
    %941 = vmatpush1.xpose.msra.mxu0 0.0
    %942 = vmatprep.subr.mxu0 0.0
    %943 = vmatpush1.xpose.msra.mxu0 0.0
    %944 = vmatprep.subr.mxu0 0.0
    %945 = vmatpush1.xpose.msra.mxu0 0.0
    %946 = vmatprep.subr.mxu0 0.0
    %947 = vmatpush1.xpose.msra.mxu0 0.0
    %948 = vmatprep.subr.mxu0 0.0
    %949 = vmatpush1.xpose.msra.mxu0 0.0
    %950 = vmatprep.subr.mxu0 0.0
    %951 = vmatpush1.xpose.msra.mxu0 0.0
    %952 = vmatprep.subr.mxu0 0.0
    %953 = vmatpush1.xpose.msra.mxu0 0.0
    %954 = vmatprep.subr.mxu0 0.0
    %955 = vmatpush1.xpose.msra.mxu0 0.0
    %956 = vmatprep.subr.mxu0 0.0
    %957 = vmatpush1.xpose.msra.mxu0 0.0
    %958 = vmatprep.subr.mxu0 0.0
    %959 = vmatpush1.xpose.msra.mxu0 0.0
    %960 = vmatprep.subr.mxu0 0.0
    %961 = vmatpush1.xpose.msra.mxu0 0.0
    %962 = vmatprep.subr.mxu0 0.0
    %963 = vmatpush1.xpose.msra.mxu0 0.0
    %964 = vmatprep.subr.mxu0 0.0
    %965 = vmatpush1.xpose.msra.mxu0 0.0
    %966 = vmatprep.subr.mxu0 0.0
    %967 = vmatpush1.xpose.msra.mxu0 0.0
    %968 = vmatprep.mubr.f32.mxu0 0.0
    %969 = vmatmul.mubr.f32.gmra.mrb[0].mxu0 %v900
    %v970 = vpop.f32.mrb[0].mxu0
    %v971 = vadd.f32 0.0, %v970
    %v972 = vpop.f32.mrb[0].mxu0
    %973 = vdwg.mxu0
    %v974 = vmul.f32 %v971, 0.35355338
    %v975 = vsel %vm179, %v974, -inf
    %976 = vmax.xlane.f32.xlu0 %v975
    %v977 = vpop.xlane.xlu0 %976
    %v978 = vsub.f32 %v974, %v977
    %v979 = vmul.f32 %v978, 1.442695
    %v980 = vpow.pop %v979
    %v981 = vsel %vm179, %v980, 0.0
    %982 = vadd.xlane.f32.xlu0 %v981
    %v983 = vpop.xlane.xlu0 %982
    %v984 = vrcp.pop %v983
    %v985 = vmul.f32 %v980, %v984
    %986 = vrot.lane.b32.xlu0 %v157, 40
    %v987 = vpop.permute.xlu0 %986
    %v990 = vsel %vm179, %v985, 0
    %992 = vmatprep.subr.mxu0 0.0
    %993 = vmatpush1.msra.mxu0 %v987
    %994 = vmatprep.subr.mxu0 0.0
    %995 = vmatpush1.msra.mxu0 0.0
    %996 = vmatprep.subr.mxu0 0.0
    %997 = vmatpush1.msra.mxu0 0.0
    %998 = vmatprep.subr.mxu0 0.0
    %999 = vmatpush1.msra.mxu0 0.0
    %1000 = vmatprep.subr.mxu0 0.0
    %1001 = vmatpush1.msra.mxu0 0.0
    %1002 = vmatprep.subr.mxu0 0.0
    %1003 = vmatpush1.msra.mxu0 0.0
    %1004 = vmatprep.subr.mxu0 0.0
    %1005 = vmatpush1.msra.mxu0 0.0
    %1006 = vmatprep.subr.mxu0 0.0
    %1007 = vmatpush1.msra.mxu0 0.0
    %1008 = vmatprep.subr.mxu0 0.0
    %1009 = vmatpush1.msra.mxu0 0.0
    %1010 = vmatprep.subr.mxu0 0.0
    %1011 = vmatpush1.msra.mxu0 0.0
    %1012 = vmatprep.subr.mxu0 0.0
    %1013 = vmatpush1.msra.mxu0 0.0
    %1014 = vmatprep.subr.mxu0 0.0
    %1015 = vmatpush1.msra.mxu0 0.0
    %1016 = vmatprep.subr.mxu0 0.0
    %1017 = vmatpush1.msra.mxu0 0.0
    %1018 = vmatprep.subr.mxu0 0.0
    %1019 = vmatpush1.msra.mxu0 0.0
    %1020 = vmatprep.subr.mxu0 0.0
    %1021 = vmatpush1.msra.mxu0 0.0
    %1022 = vmatprep.subr.mxu0 0.0
    %1023 = vmatpush1.msra.mxu0 0.0
    %1024 = vmatprep.subr.mxu0 0.0
    %1025 = vmatpush1.msra.mxu0 0.0
    %1026 = vmatprep.subr.mxu0 0.0
    %1027 = vmatpush1.msra.mxu0 0.0
    %1028 = vmatprep.subr.mxu0 0.0
    %1029 = vmatpush1.msra.mxu0 0.0
    %1030 = vmatprep.subr.mxu0 0.0
    %1031 = vmatpush1.msra.mxu0 0.0
    %1032 = vmatprep.subr.mxu0 0.0
    %1033 = vmatpush1.msra.mxu0 0.0
    %1034 = vmatprep.subr.mxu0 0.0
    %1035 = vmatpush1.msra.mxu0 0.0
    %1036 = vmatprep.subr.mxu0 0.0
    %1037 = vmatpush1.msra.mxu0 0.0
    %1038 = vmatprep.subr.mxu0 0.0
    %1039 = vmatpush1.msra.mxu0 0.0
    %1040 = vmatprep.subr.mxu0 0.0
    %1041 = vmatpush1.msra.mxu0 0.0
    %1042 = vmatprep.subr.mxu0 0.0
    %1043 = vmatpush1.msra.mxu0 0.0
    %1044 = vmatprep.subr.mxu0 0.0
    %1045 = vmatpush1.msra.mxu0 0.0
    %1046 = vmatprep.subr.mxu0 0.0
    %1047 = vmatpush1.msra.mxu0 0.0
    %1048 = vmatprep.subr.mxu0 0.0
    %1049 = vmatpush1.msra.mxu0 0.0
    %1050 = vmatprep.subr.mxu0 0.0
    %1051 = vmatpush1.msra.mxu0 0.0
    %1052 = vmatprep.subr.mxu0 0.0
    %1053 = vmatpush1.msra.mxu0 0.0
    %1054 = vmatprep.subr.mxu0 0.0
    %1055 = vmatpush1.msra.mxu0 0.0
    %1056 = vmatprep.mubr.f32.mxu0 0.0
    %1057 = vmatmul.mubr.f32.gmra.mrb[0].mxu0 %v990
    %v1058 = vpop.f32.mrb[0].mxu0
    %v1059 = vadd.f32 0.0, %v1058
    %v1060 = vpop.f32.mrb[0].mxu0
    %1061 = vdwg.mxu0
    %v1063 = vsel %vm179, %v1059, 0
    %1065 = vmatprep.subr.mxu0 0.0
    %1066 = vmatpush1.msra.mxu0 %v168
    %1067 = vmatprep.subr.mxu0 0.0
    %1068 = vmatpush1.msra.mxu0 0.0
    %1069 = vmatprep.subr.mxu0 0.0
    %1070 = vmatpush1.msra.mxu0 0.0
    %1071 = vmatprep.subr.mxu0 0.0
    %1072 = vmatpush1.msra.mxu0 0.0
    %1073 = vmatprep.subr.mxu0 0.0
    %1074 = vmatpush1.msra.mxu0 0.0
    %1075 = vmatprep.subr.mxu0 0.0
    %1076 = vmatpush1.msra.mxu0 0.0
    %1077 = vmatprep.subr.mxu0 0.0
    %1078 = vmatpush1.msra.mxu0 0.0
    %1079 = vmatprep.subr.mxu0 0.0
    %1080 = vmatpush1.msra.mxu0 0.0
    %1081 = vmatprep.subr.mxu0 0.0
    %1082 = vmatpush1.msra.mxu0 0.0
    %1083 = vmatprep.subr.mxu0 0.0
    %1084 = vmatpush1.msra.mxu0 0.0
    %1085 = vmatprep.subr.mxu0 0.0
    %1086 = vmatpush1.msra.mxu0 0.0
    %1087 = vmatprep.subr.mxu0 0.0
    %1088 = vmatpush1.msra.mxu0 0.0
    %1089 = vmatprep.subr.mxu0 0.0
    %1090 = vmatpush1.msra.mxu0 0.0
    %1091 = vmatprep.subr.mxu0 0.0
    %1092 = vmatpush1.msra.mxu0 0.0
    %1093 = vmatprep.subr.mxu0 0.0
    %1094 = vmatpush1.msra.mxu0 0.0
    %1095 = vmatprep.subr.mxu0 0.0
    %1096 = vmatpush1.msra.mxu0 0.0
    %1097 = vmatprep.subr.mxu0 0.0
    %1098 = vmatpush1.msra.mxu0 0.0
    %1099 = vmatprep.subr.mxu0 0.0
    %1100 = vmatpush1.msra.mxu0 0.0
    %1101 = vmatprep.subr.mxu0 0.0
    %1102 = vmatpush1.msra.mxu0 0.0
    %1103 = vmatprep.subr.mxu0 0.0
    %1104 = vmatpush1.msra.mxu0 0.0
    %1105 = vmatprep.subr.mxu0 0.0
    %1106 = vmatpush1.msra.mxu0 0.0
    %1107 = vmatprep.subr.mxu0 0.0
    %1108 = vmatpush1.msra.mxu0 0.0
    %1109 = vmatprep.subr.mxu0 0.0
    %1110 = vmatpush1.msra.mxu0 0.0
    %1111 = vmatprep.subr.mxu0 0.0
    %1112 = vmatpush1.msra.mxu0 0.0
    %1113 = vmatprep.subr.mxu0 0.0
    %1114 = vmatpush1.msra.mxu0 0.0
    %1115 = vmatprep.subr.mxu0 0.0
    %1116 = vmatpush1.msra.mxu0 0.0
    %1117 = vmatprep.subr.mxu0 0.0
    %1118 = vmatpush1.msra.mxu0 0.0
    %1119 = vmatprep.subr.mxu0 0.0
    %1120 = vmatpush1.msra.mxu0 0.0
    %1121 = vmatprep.subr.mxu0 0.0
    %1122 = vmatpush1.msra.mxu0 0.0
    %1123 = vmatprep.subr.mxu0 0.0
    %1124 = vmatpush1.msra.mxu0 0.0
    %1125 = vmatprep.subr.mxu0 0.0
    %1126 = vmatpush1.msra.mxu0 0.0
    %1127 = vmatprep.subr.mxu0 0.0
    %1128 = vmatpush1.msra.mxu0 0.0
    %1129 = vmatprep.mubr.f32.mxu0 0.0
    %1130 = vmatmul.mubr.f32.gmra.mrb[0].mxu0 %v1063
    %v1131 = vpop.f32.mrb[0].mxu0
    %v1132 = vadd.f32 0.0, %v1131
    %v1133 = vpop.f32.mrb[0].mxu0
    %1134 = vdwg.mxu0
    %v1135 = vadd.f32 %v895, %v1132
    %vm1136 = vcmask 261120
    %1137 = vst.msk [vmem:[#allocation8] sm:$0xff] %vm1136, %v1135
    %1139 = vrot.lane.b32.xlu0 %v162, 96
    %v1140 = vpop.permute.xlu0 %1139
    %v1141 = vsel %vm179, %v162, 0
    %v1143 = vsel %vm179, %v1140, 0
    %1145 = vmatprep.subr.mxu0 0.0
    %1146 = vmatpush1.xpose.msra.mxu0 %v1143
    %1147 = vmatprep.subr.mxu0 0.0
    %1148 = vmatpush1.xpose.msra.mxu0 0.0
    %1149 = vmatprep.subr.mxu0 0.0
    %1150 = vmatpush1.xpose.msra.mxu0 0.0
    %1151 = vmatprep.subr.mxu0 0.0
    %1152 = vmatpush1.xpose.msra.mxu0 0.0
    %1153 = vmatprep.subr.mxu0 0.0
    %1154 = vmatpush1.xpose.msra.mxu0 0.0
    %1155 = vmatprep.subr.mxu0 0.0
    %1156 = vmatpush1.xpose.msra.mxu0 0.0
    %1157 = vmatprep.subr.mxu0 0.0
    %1158 = vmatpush1.xpose.msra.mxu0 0.0
    %1159 = vmatprep.subr.mxu0 0.0
    %1160 = vmatpush1.xpose.msra.mxu0 0.0
    %1161 = vmatprep.subr.mxu0 0.0
    %1162 = vmatpush1.xpose.msra.mxu0 0.0
    %1163 = vmatprep.subr.mxu0 0.0
    %1164 = vmatpush1.xpose.msra.mxu0 0.0
    %1165 = vmatprep.subr.mxu0 0.0
    %1166 = vmatpush1.xpose.msra.mxu0 0.0
    %1167 = vmatprep.subr.mxu0 0.0
    %1168 = vmatpush1.xpose.msra.mxu0 0.0
    %1169 = vmatprep.subr.mxu0 0.0
    %1170 = vmatpush1.xpose.msra.mxu0 0.0
    %1171 = vmatprep.subr.mxu0 0.0
    %1172 = vmatpush1.xpose.msra.mxu0 0.0
    %1173 = vmatprep.subr.mxu0 0.0
    %1174 = vmatpush1.xpose.msra.mxu0 0.0
    %1175 = vmatprep.subr.mxu0 0.0
    %1176 = vmatpush1.xpose.msra.mxu0 0.0
    %1177 = vmatprep.subr.mxu0 0.0
    %1178 = vmatpush1.xpose.msra.mxu0 0.0
    %1179 = vmatprep.subr.mxu0 0.0
    %1180 = vmatpush1.xpose.msra.mxu0 0.0
    %1181 = vmatprep.subr.mxu0 0.0
    %1182 = vmatpush1.xpose.msra.mxu0 0.0
    %1183 = vmatprep.subr.mxu0 0.0
    %1184 = vmatpush1.xpose.msra.mxu0 0.0
    %1185 = vmatprep.subr.mxu0 0.0
    %1186 = vmatpush1.xpose.msra.mxu0 0.0
    %1187 = vmatprep.subr.mxu0 0.0
    %1188 = vmatpush1.xpose.msra.mxu0 0.0
    %1189 = vmatprep.subr.mxu0 0.0
    %1190 = vmatpush1.xpose.msra.mxu0 0.0
    %1191 = vmatprep.subr.mxu0 0.0
    %1192 = vmatpush1.xpose.msra.mxu0 0.0
    %1193 = vmatprep.subr.mxu0 0.0
    %1194 = vmatpush1.xpose.msra.mxu0 0.0
    %1195 = vmatprep.subr.mxu0 0.0
    %1196 = vmatpush1.xpose.msra.mxu0 0.0
    %1197 = vmatprep.subr.mxu0 0.0
    %1198 = vmatpush1.xpose.msra.mxu0 0.0
    %1199 = vmatprep.subr.mxu0 0.0
    %1200 = vmatpush1.xpose.msra.mxu0 0.0
    %1201 = vmatprep.subr.mxu0 0.0
    %1202 = vmatpush1.xpose.msra.mxu0 0.0
    %1203 = vmatprep.subr.mxu0 0.0
    %1204 = vmatpush1.xpose.msra.mxu0 0.0
    %1205 = vmatprep.subr.mxu0 0.0
    %1206 = vmatpush1.xpose.msra.mxu0 0.0
    %1207 = vmatprep.subr.mxu0 0.0
    %1208 = vmatpush1.xpose.msra.mxu0 0.0
    %1209 = vmatprep.mubr.f32.mxu0 0.0
    %1210 = vmatmul.mubr.f32.gmra.mrb[0].mxu0 %v1141
    %v1211 = vpop.f32.mrb[0].mxu0
    %v1212 = vadd.f32 0.0, %v1211
    %v1213 = vpop.f32.mrb[0].mxu0
    %1214 = vdwg.mxu0
    %v1215 = vmul.f32 %v1212, 0.35355338
    %v1216 = vsel %vm179, %v1215, -inf
    %1217 = vmax.xlane.f32.xlu0 %v1216
    %v1218 = vpop.xlane.xlu0 %1217
    %v1219 = vsub.f32 %v1215, %v1218
    %v1220 = vmul.f32 %v1219, 1.442695
    %v1221 = vpow.pop %v1220
    %v1222 = vsel %vm179, %v1221, 0.0
    %1223 = vadd.xlane.f32.xlu0 %v1222
    %v1224 = vpop.xlane.xlu0 %1223
    %v1225 = vrcp.pop %v1224
    %v1226 = vmul.f32 %v1221, %v1225
    %1227 = vrot.lane.b32.xlu0 %v162, 64
    %v1228 = vpop.permute.xlu0 %1227
    %v1231 = vsel %vm179, %v1226, 0
    %1233 = vmatprep.subr.mxu0 0.0
    %1234 = vmatpush1.msra.mxu0 %v1228
    %1235 = vmatprep.subr.mxu0 0.0
    %1236 = vmatpush1.msra.mxu0 0.0
    %1237 = vmatprep.subr.mxu0 0.0
    %1238 = vmatpush1.msra.mxu0 0.0
    %1239 = vmatprep.subr.mxu0 0.0
    %1240 = vmatpush1.msra.mxu0 0.0
    %1241 = vmatprep.subr.mxu0 0.0
    %1242 = vmatpush1.msra.mxu0 0.0
    %1243 = vmatprep.subr.mxu0 0.0
    %1244 = vmatpush1.msra.mxu0 0.0
    %1245 = vmatprep.subr.mxu0 0.0
    %1246 = vmatpush1.msra.mxu0 0.0
    %1247 = vmatprep.subr.mxu0 0.0
    %1248 = vmatpush1.msra.mxu0 0.0
    %1249 = vmatprep.subr.mxu0 0.0
    %1250 = vmatpush1.msra.mxu0 0.0
    %1251 = vmatprep.subr.mxu0 0.0
    %1252 = vmatpush1.msra.mxu0 0.0
    %1253 = vmatprep.subr.mxu0 0.0
    %1254 = vmatpush1.msra.mxu0 0.0
    %1255 = vmatprep.subr.mxu0 0.0
    %1256 = vmatpush1.msra.mxu0 0.0
    %1257 = vmatprep.subr.mxu0 0.0
    %1258 = vmatpush1.msra.mxu0 0.0
    %1259 = vmatprep.subr.mxu0 0.0
    %1260 = vmatpush1.msra.mxu0 0.0
    %1261 = vmatprep.subr.mxu0 0.0
    %1262 = vmatpush1.msra.mxu0 0.0
    %1263 = vmatprep.subr.mxu0 0.0
    %1264 = vmatpush1.msra.mxu0 0.0
    %1265 = vmatprep.subr.mxu0 0.0
    %1266 = vmatpush1.msra.mxu0 0.0
    %1267 = vmatprep.subr.mxu0 0.0
    %1268 = vmatpush1.msra.mxu0 0.0
    %1269 = vmatprep.subr.mxu0 0.0
    %1270 = vmatpush1.msra.mxu0 0.0
    %1271 = vmatprep.subr.mxu0 0.0
    %1272 = vmatpush1.msra.mxu0 0.0
    %1273 = vmatprep.subr.mxu0 0.0
    %1274 = vmatpush1.msra.mxu0 0.0
    %1275 = vmatprep.subr.mxu0 0.0
    %1276 = vmatpush1.msra.mxu0 0.0
    %1277 = vmatprep.subr.mxu0 0.0
    %1278 = vmatpush1.msra.mxu0 0.0
    %1279 = vmatprep.subr.mxu0 0.0
    %1280 = vmatpush1.msra.mxu0 0.0
    %1281 = vmatprep.subr.mxu0 0.0
    %1282 = vmatpush1.msra.mxu0 0.0
    %1283 = vmatprep.subr.mxu0 0.0
    %1284 = vmatpush1.msra.mxu0 0.0
    %1285 = vmatprep.subr.mxu0 0.0
    %1286 = vmatpush1.msra.mxu0 0.0
    %1287 = vmatprep.subr.mxu0 0.0
    %1288 = vmatpush1.msra.mxu0 0.0
    %1289 = vmatprep.subr.mxu0 0.0
    %1290 = vmatpush1.msra.mxu0 0.0
    %1291 = vmatprep.subr.mxu0 0.0
    %1292 = vmatpush1.msra.mxu0 0.0
    %1293 = vmatprep.subr.mxu0 0.0
    %1294 = vmatpush1.msra.mxu0 0.0
    %1295 = vmatprep.subr.mxu0 0.0
    %1296 = vmatpush1.msra.mxu0 0.0
    %1297 = vmatprep.mubr.f32.mxu0 0.0
    %1298 = vmatmul.mubr.f32.gmra.mrb[0].mxu0 %v1231
    %v1299 = vpop.f32.mrb[0].mxu0
    %v1300 = vadd.f32 0.0, %v1299
    %v1301 = vpop.f32.mrb[0].mxu0
    %1302 = vdwg.mxu0
    %v1304 = vsel %vm179, %v1300, 0
    %1306 = vmatprep.subr.mxu0 0.0
    %1307 = vmatpush1.msra.mxu0 %v165
    %1308 = vmatprep.subr.mxu0 0.0
    %1309 = vmatpush1.msra.mxu0 0.0
    %1310 = vmatprep.subr.mxu0 0.0
    %1311 = vmatpush1.msra.mxu0 0.0
    %1312 = vmatprep.subr.mxu0 0.0
    %1313 = vmatpush1.msra.mxu0 0.0
    %1314 = vmatprep.subr.mxu0 0.0
    %1315 = vmatpush1.msra.mxu0 0.0
    %1316 = vmatprep.subr.mxu0 0.0
    %1317 = vmatpush1.msra.mxu0 0.0
    %1318 = vmatprep.subr.mxu0 0.0
    %1319 = vmatpush1.msra.mxu0 0.0
    %1320 = vmatprep.subr.mxu0 0.0
    %1321 = vmatpush1.msra.mxu0 0.0
    %1322 = vmatprep.subr.mxu0 0.0
    %1323 = vmatpush1.msra.mxu0 0.0
    %1324 = vmatprep.subr.mxu0 0.0
    %1325 = vmatpush1.msra.mxu0 0.0
    %1326 = vmatprep.subr.mxu0 0.0
    %1327 = vmatpush1.msra.mxu0 0.0
    %1328 = vmatprep.subr.mxu0 0.0
    %1329 = vmatpush1.msra.mxu0 0.0
    %1330 = vmatprep.subr.mxu0 0.0
    %1331 = vmatpush1.msra.mxu0 0.0
    %1332 = vmatprep.subr.mxu0 0.0
    %1333 = vmatpush1.msra.mxu0 0.0
    %1334 = vmatprep.subr.mxu0 0.0
    %1335 = vmatpush1.msra.mxu0 0.0
    %1336 = vmatprep.subr.mxu0 0.0
    %1337 = vmatpush1.msra.mxu0 0.0
    %1338 = vmatprep.subr.mxu0 0.0
    %1339 = vmatpush1.msra.mxu0 0.0
    %1340 = vmatprep.subr.mxu0 0.0
    %1341 = vmatpush1.msra.mxu0 0.0
    %1342 = vmatprep.subr.mxu0 0.0
    %1343 = vmatpush1.msra.mxu0 0.0
    %1344 = vmatprep.subr.mxu0 0.0
    %1345 = vmatpush1.msra.mxu0 0.0
    %1346 = vmatprep.subr.mxu0 0.0
    %1347 = vmatpush1.msra.mxu0 0.0
    %1348 = vmatprep.subr.mxu0 0.0
    %1349 = vmatpush1.msra.mxu0 0.0
    %1350 = vmatprep.subr.mxu0 0.0
    %1351 = vmatpush1.msra.mxu0 0.0
    %1352 = vmatprep.subr.mxu0 0.0
    %1353 = vmatpush1.msra.mxu0 0.0
    %1354 = vmatprep.subr.mxu0 0.0
    %1355 = vmatpush1.msra.mxu0 0.0
    %1356 = vmatprep.subr.mxu0 0.0
    %1357 = vmatpush1.msra.mxu0 0.0
    %1358 = vmatprep.subr.mxu0 0.0
    %1359 = vmatpush1.msra.mxu0 0.0
    %1360 = vmatprep.subr.mxu0 0.0
    %1361 = vmatpush1.msra.mxu0 0.0
    %1362 = vmatprep.subr.mxu0 0.0
    %1363 = vmatpush1.msra.mxu0 0.0
    %1364 = vmatprep.subr.mxu0 0.0
    %1365 = vmatpush1.msra.mxu0 0.0
    %1366 = vmatprep.subr.mxu0 0.0
    %1367 = vmatpush1.msra.mxu0 0.0
    %1368 = vmatprep.subr.mxu0 0.0
    %1369 = vmatpush1.msra.mxu0 0.0
    %1370 = vmatprep.mubr.f32.mxu0 0.0
    %1371 = vmatmul.mubr.f32.gmra.mrb[0].mxu0 %v1304
    %v1372 = vpop.f32.mrb[0].mxu0
    %v1373 = vadd.f32 0.0, %v1372
    %v1374 = vpop.f32.mrb[0].mxu0
    %1375 = vdwg.mxu0
    %v1376 = vadd.f32 %v174, %v1373
    %1377 = vrot.lane.b32.xlu0 %v162, 120
    %v1378 = vpop.permute.xlu0 %1377
    %1379 = vrot.lane.b32.xlu0 %v162, 88
    %v1380 = vpop.permute.xlu0 %1379
    %v1381 = vsel %vm179, %v1378, 0
    %v1383 = vsel %vm179, %v1380, 0
    %1385 = vmatprep.subr.mxu0 0.0
    %1386 = vmatpush1.xpose.msra.mxu0 %v1383
    %1387 = vmatprep.subr.mxu0 0.0
    %1388 = vmatpush1.xpose.msra.mxu0 0.0
    %1389 = vmatprep.subr.mxu0 0.0
    %1390 = vmatpush1.xpose.msra.mxu0 0.0
    %1391 = vmatprep.subr.mxu0 0.0
    %1392 = vmatpush1.xpose.msra.mxu0 0.0
    %1393 = vmatprep.subr.mxu0 0.0
    %1394 = vmatpush1.xpose.msra.mxu0 0.0
    %1395 = vmatprep.subr.mxu0 0.0
    %1396 = vmatpush1.xpose.msra.mxu0 0.0
    %1397 = vmatprep.subr.mxu0 0.0
    %1398 = vmatpush1.xpose.msra.mxu0 0.0
    %1399 = vmatprep.subr.mxu0 0.0
    %1400 = vmatpush1.xpose.msra.mxu0 0.0
    %1401 = vmatprep.subr.mxu0 0.0
    %1402 = vmatpush1.xpose.msra.mxu0 0.0
    %1403 = vmatprep.subr.mxu0 0.0
    %1404 = vmatpush1.xpose.msra.mxu0 0.0
    %1405 = vmatprep.subr.mxu0 0.0
    %1406 = vmatpush1.xpose.msra.mxu0 0.0
    %1407 = vmatprep.subr.mxu0 0.0
    %1408 = vmatpush1.xpose.msra.mxu0 0.0
    %1409 = vmatprep.subr.mxu0 0.0
    %1410 = vmatpush1.xpose.msra.mxu0 0.0
    %1411 = vmatprep.subr.mxu0 0.0
    %1412 = vmatpush1.xpose.msra.mxu0 0.0
    %1413 = vmatprep.subr.mxu0 0.0
    %1414 = vmatpush1.xpose.msra.mxu0 0.0
    %1415 = vmatprep.subr.mxu0 0.0
    %1416 = vmatpush1.xpose.msra.mxu0 0.0
    %1417 = vmatprep.subr.mxu0 0.0
    %1418 = vmatpush1.xpose.msra.mxu0 0.0
    %1419 = vmatprep.subr.mxu0 0.0
    %1420 = vmatpush1.xpose.msra.mxu0 0.0
    %1421 = vmatprep.subr.mxu0 0.0
    %1422 = vmatpush1.xpose.msra.mxu0 0.0
    %1423 = vmatprep.subr.mxu0 0.0
    %1424 = vmatpush1.xpose.msra.mxu0 0.0
    %1425 = vmatprep.subr.mxu0 0.0
    %1426 = vmatpush1.xpose.msra.mxu0 0.0
    %1427 = vmatprep.subr.mxu0 0.0
    %1428 = vmatpush1.xpose.msra.mxu0 0.0
    %1429 = vmatprep.subr.mxu0 0.0
    %1430 = vmatpush1.xpose.msra.mxu0 0.0
    %1431 = vmatprep.subr.mxu0 0.0
    %1432 = vmatpush1.xpose.msra.mxu0 0.0
    %1433 = vmatprep.subr.mxu0 0.0
    %1434 = vmatpush1.xpose.msra.mxu0 0.0
    %1435 = vmatprep.subr.mxu0 0.0
    %1436 = vmatpush1.xpose.msra.mxu0 0.0
    %1437 = vmatprep.subr.mxu0 0.0
    %1438 = vmatpush1.xpose.msra.mxu0 0.0
    %1439 = vmatprep.subr.mxu0 0.0
    %1440 = vmatpush1.xpose.msra.mxu0 0.0
    %1441 = vmatprep.subr.mxu0 0.0
    %1442 = vmatpush1.xpose.msra.mxu0 0.0
    %1443 = vmatprep.subr.mxu0 0.0
    %1444 = vmatpush1.xpose.msra.mxu0 0.0
    %1445 = vmatprep.subr.mxu0 0.0
    %1446 = vmatpush1.xpose.msra.mxu0 0.0
    %1447 = vmatprep.subr.mxu0 0.0
    %1448 = vmatpush1.xpose.msra.mxu0 0.0
    %1449 = vmatprep.mubr.f32.mxu0 0.0
    %1450 = vmatmul.mubr.f32.gmra.mrb[0].mxu0 %v1381
    %v1451 = vpop.f32.mrb[0].mxu0
    %v1452 = vadd.f32 0.0, %v1451
    %v1453 = vpop.f32.mrb[0].mxu0
    %1454 = vdwg.mxu0
    %v1455 = vmul.f32 %v1452, 0.35355338
    %v1456 = vsel %vm179, %v1455, -inf
    %1457 = vmax.xlane.f32.xlu0 %v1456
    %v1458 = vpop.xlane.xlu0 %1457
    %v1459 = vsub.f32 %v1455, %v1458
    %v1460 = vmul.f32 %v1459, 1.442695
    %v1461 = vpow.pop %v1460
    %v1462 = vsel %vm179, %v1461, 0.0
    %1463 = vadd.xlane.f32.xlu0 %v1462
    %v1464 = vpop.xlane.xlu0 %1463
    %v1465 = vrcp.pop %v1464
    %v1466 = vmul.f32 %v1461, %v1465
    %1467 = vrot.lane.b32.xlu0 %v162, 56
    %v1468 = vpop.permute.xlu0 %1467
    %v1471 = vsel %vm179, %v1466, 0
    %1473 = vmatprep.subr.mxu0 0.0
    %1474 = vmatpush1.msra.mxu0 %v1468
    %1475 = vmatprep.subr.mxu0 0.0
    %1476 = vmatpush1.msra.mxu0 0.0
    %1477 = vmatprep.subr.mxu0 0.0
    %1478 = vmatpush1.msra.mxu0 0.0
    %1479 = vmatprep.subr.mxu0 0.0
    %1480 = vmatpush1.msra.mxu0 0.0
    %1481 = vmatprep.subr.mxu0 0.0
    %1482 = vmatpush1.msra.mxu0 0.0
    %1483 = vmatprep.subr.mxu0 0.0
    %1484 = vmatpush1.msra.mxu0 0.0
    %1485 = vmatprep.subr.mxu0 0.0
    %1486 = vmatpush1.msra.mxu0 0.0
    %1487 = vmatprep.subr.mxu0 0.0
    %1488 = vmatpush1.msra.mxu0 0.0
    %1489 = vmatprep.subr.mxu0 0.0
    %1490 = vmatpush1.msra.mxu0 0.0
    %1491 = vmatprep.subr.mxu0 0.0
    %1492 = vmatpush1.msra.mxu0 0.0
    %1493 = vmatprep.subr.mxu0 0.0
    %1494 = vmatpush1.msra.mxu0 0.0
    %1495 = vmatprep.subr.mxu0 0.0
    %1496 = vmatpush1.msra.mxu0 0.0
    %1497 = vmatprep.subr.mxu0 0.0
    %1498 = vmatpush1.msra.mxu0 0.0
    %1499 = vmatprep.subr.mxu0 0.0
    %1500 = vmatpush1.msra.mxu0 0.0
    %1501 = vmatprep.subr.mxu0 0.0
    %1502 = vmatpush1.msra.mxu0 0.0
    %1503 = vmatprep.subr.mxu0 0.0
    %1504 = vmatpush1.msra.mxu0 0.0
    %1505 = vmatprep.subr.mxu0 0.0
    %1506 = vmatpush1.msra.mxu0 0.0
    %1507 = vmatprep.subr.mxu0 0.0
    %1508 = vmatpush1.msra.mxu0 0.0
    %1509 = vmatprep.subr.mxu0 0.0
    %1510 = vmatpush1.msra.mxu0 0.0
    %1511 = vmatprep.subr.mxu0 0.0
    %1512 = vmatpush1.msra.mxu0 0.0
    %1513 = vmatprep.subr.mxu0 0.0
    %1514 = vmatpush1.msra.mxu0 0.0
    %1515 = vmatprep.subr.mxu0 0.0
    %1516 = vmatpush1.msra.mxu0 0.0
    %1517 = vmatprep.subr.mxu0 0.0
    %1518 = vmatpush1.msra.mxu0 0.0
    %1519 = vmatprep.subr.mxu0 0.0
    %1520 = vmatpush1.msra.mxu0 0.0
    %1521 = vmatprep.subr.mxu0 0.0
    %1522 = vmatpush1.msra.mxu0 0.0
    %1523 = vmatprep.subr.mxu0 0.0
    %1524 = vmatpush1.msra.mxu0 0.0
    %1525 = vmatprep.subr.mxu0 0.0
    %1526 = vmatpush1.msra.mxu0 0.0
    %1527 = vmatprep.subr.mxu0 0.0
    %1528 = vmatpush1.msra.mxu0 0.0
    %1529 = vmatprep.subr.mxu0 0.0
    %1530 = vmatpush1.msra.mxu0 0.0
    %1531 = vmatprep.subr.mxu0 0.0
    %1532 = vmatpush1.msra.mxu0 0.0
    %1533 = vmatprep.subr.mxu0 0.0
    %1534 = vmatpush1.msra.mxu0 0.0
    %1535 = vmatprep.subr.mxu0 0.0
    %1536 = vmatpush1.msra.mxu0 0.0
    %1537 = vmatprep.mubr.f32.mxu0 0.0
    %1538 = vmatmul.mubr.f32.gmra.mrb[0].mxu0 %v1471
    %v1539 = vpop.f32.mrb[0].mxu0
    %v1540 = vadd.f32 0.0, %v1539
    %v1541 = vpop.f32.mrb[0].mxu0
    %1542 = vdwg.mxu0
    %v1544 = vsel %vm179, %v1540, 0
    %1546 = vmatprep.subr.mxu0 0.0
    %1547 = vmatpush1.msra.mxu0 %v166
    %1548 = vmatprep.subr.mxu0 0.0
    %1549 = vmatpush1.msra.mxu0 0.0
    %1550 = vmatprep.subr.mxu0 0.0
    %1551 = vmatpush1.msra.mxu0 0.0
    %1552 = vmatprep.subr.mxu0 0.0
    %1553 = vmatpush1.msra.mxu0 0.0
    %1554 = vmatprep.subr.mxu0 0.0
    %1555 = vmatpush1.msra.mxu0 0.0
    %1556 = vmatprep.subr.mxu0 0.0
    %1557 = vmatpush1.msra.mxu0 0.0
    %1558 = vmatprep.subr.mxu0 0.0
    %1559 = vmatpush1.msra.mxu0 0.0
    %1560 = vmatprep.subr.mxu0 0.0
    %1561 = vmatpush1.msra.mxu0 0.0
    %1562 = vmatprep.subr.mxu0 0.0
    %1563 = vmatpush1.msra.mxu0 0.0
    %1564 = vmatprep.subr.mxu0 0.0
    %1565 = vmatpush1.msra.mxu0 0.0
    %1566 = vmatprep.subr.mxu0 0.0
    %1567 = vmatpush1.msra.mxu0 0.0
    %1568 = vmatprep.subr.mxu0 0.0
    %1569 = vmatpush1.msra.mxu0 0.0
    %1570 = vmatprep.subr.mxu0 0.0
    %1571 = vmatpush1.msra.mxu0 0.0
    %1572 = vmatprep.subr.mxu0 0.0
    %1573 = vmatpush1.msra.mxu0 0.0
    %1574 = vmatprep.subr.mxu0 0.0
    %1575 = vmatpush1.msra.mxu0 0.0
    %1576 = vmatprep.subr.mxu0 0.0
    %1577 = vmatpush1.msra.mxu0 0.0
    %1578 = vmatprep.subr.mxu0 0.0
    %1579 = vmatpush1.msra.mxu0 0.0
    %1580 = vmatprep.subr.mxu0 0.0
    %1581 = vmatpush1.msra.mxu0 0.0
    %1582 = vmatprep.subr.mxu0 0.0
    %1583 = vmatpush1.msra.mxu0 0.0
    %1584 = vmatprep.subr.mxu0 0.0
    %1585 = vmatpush1.msra.mxu0 0.0
    %1586 = vmatprep.subr.mxu0 0.0
    %1587 = vmatpush1.msra.mxu0 0.0
    %1588 = vmatprep.subr.mxu0 0.0
    %1589 = vmatpush1.msra.mxu0 0.0
    %1590 = vmatprep.subr.mxu0 0.0
    %1591 = vmatpush1.msra.mxu0 0.0
    %1592 = vmatprep.subr.mxu0 0.0
    %1593 = vmatpush1.msra.mxu0 0.0
    %1594 = vmatprep.subr.mxu0 0.0
    %1595 = vmatpush1.msra.mxu0 0.0
    %1596 = vmatprep.subr.mxu0 0.0
    %1597 = vmatpush1.msra.mxu0 0.0
    %1598 = vmatprep.subr.mxu0 0.0
    %1599 = vmatpush1.msra.mxu0 0.0
    %1600 = vmatprep.subr.mxu0 0.0
    %1601 = vmatpush1.msra.mxu0 0.0
    %1602 = vmatprep.subr.mxu0 0.0
    %1603 = vmatpush1.msra.mxu0 0.0
    %1604 = vmatprep.subr.mxu0 0.0
    %1605 = vmatpush1.msra.mxu0 0.0
    %1606 = vmatprep.subr.mxu0 0.0
    %1607 = vmatpush1.msra.mxu0 0.0
    %1608 = vmatprep.subr.mxu0 0.0
    %1609 = vmatpush1.msra.mxu0 0.0
    %1610 = vmatprep.mubr.f32.mxu0 0.0
    %1611 = vmatmul.mubr.f32.gmra.mrb[0].mxu0 %v1544
    %v1612 = vpop.f32.mrb[0].mxu0
    %v1613 = vadd.f32 0.0, %v1612
    %v1614 = vpop.f32.mrb[0].mxu0
    %1615 = vdwg.mxu0
    %v1616 = vadd.f32 %v1376, %v1613
    %1617 = vrot.lane.b32.xlu0 %v162, 112
    %v1618 = vpop.permute.xlu0 %1617
    %1619 = vrot.lane.b32.xlu0 %v162, 80
    %v1620 = vpop.permute.xlu0 %1619
    %v1621 = vsel %vm179, %v1618, 0
    %v1623 = vsel %vm179, %v1620, 0
    %1625 = vmatprep.subr.mxu0 0.0
    %1626 = vmatpush1.xpose.msra.mxu0 %v1623
    %1627 = vmatprep.subr.mxu0 0.0
    %1628 = vmatpush1.xpose.msra.mxu0 0.0
    %1629 = vmatprep.subr.mxu0 0.0
    %1630 = vmatpush1.xpose.msra.mxu0 0.0
    %1631 = vmatprep.subr.mxu0 0.0
    %1632 = vmatpush1.xpose.msra.mxu0 0.0
    %1633 = vmatprep.subr.mxu0 0.0
    %1634 = vmatpush1.xpose.msra.mxu0 0.0
    %1635 = vmatprep.subr.mxu0 0.0
    %1636 = vmatpush1.xpose.msra.mxu0 0.0
    %1637 = vmatprep.subr.mxu0 0.0
    %1638 = vmatpush1.xpose.msra.mxu0 0.0
    %1639 = vmatprep.subr.mxu0 0.0
    %1640 = vmatpush1.xpose.msra.mxu0 0.0
    %1641 = vmatprep.subr.mxu0 0.0
    %1642 = vmatpush1.xpose.msra.mxu0 0.0
    %1643 = vmatprep.subr.mxu0 0.0
    %1644 = vmatpush1.xpose.msra.mxu0 0.0
    %1645 = vmatprep.subr.mxu0 0.0
    %1646 = vmatpush1.xpose.msra.mxu0 0.0
    %1647 = vmatprep.subr.mxu0 0.0
    %1648 = vmatpush1.xpose.msra.mxu0 0.0
    %1649 = vmatprep.subr.mxu0 0.0
    %1650 = vmatpush1.xpose.msra.mxu0 0.0
    %1651 = vmatprep.subr.mxu0 0.0
    %1652 = vmatpush1.xpose.msra.mxu0 0.0
    %1653 = vmatprep.subr.mxu0 0.0
    %1654 = vmatpush1.xpose.msra.mxu0 0.0
    %1655 = vmatprep.subr.mxu0 0.0
    %1656 = vmatpush1.xpose.msra.mxu0 0.0
    %1657 = vmatprep.subr.mxu0 0.0
    %1658 = vmatpush1.xpose.msra.mxu0 0.0
    %1659 = vmatprep.subr.mxu0 0.0
    %1660 = vmatpush1.xpose.msra.mxu0 0.0
    %1661 = vmatprep.subr.mxu0 0.0
    %1662 = vmatpush1.xpose.msra.mxu0 0.0
    %1663 = vmatprep.subr.mxu0 0.0
    %1664 = vmatpush1.xpose.msra.mxu0 0.0
    %1665 = vmatprep.subr.mxu0 0.0
    %1666 = vmatpush1.xpose.msra.mxu0 0.0
    %1667 = vmatprep.subr.mxu0 0.0
    %1668 = vmatpush1.xpose.msra.mxu0 0.0
    %1669 = vmatprep.subr.mxu0 0.0
    %1670 = vmatpush1.xpose.msra.mxu0 0.0
    %1671 = vmatprep.subr.mxu0 0.0
    %1672 = vmatpush1.xpose.msra.mxu0 0.0
    %1673 = vmatprep.subr.mxu0 0.0
    %1674 = vmatpush1.xpose.msra.mxu0 0.0
    %1675 = vmatprep.subr.mxu0 0.0
    %1676 = vmatpush1.xpose.msra.mxu0 0.0
    %1677 = vmatprep.subr.mxu0 0.0
    %1678 = vmatpush1.xpose.msra.mxu0 0.0
    %1679 = vmatprep.subr.mxu0 0.0
    %1680 = vmatpush1.xpose.msra.mxu0 0.0
    %1681 = vmatprep.subr.mxu0 0.0
    %1682 = vmatpush1.xpose.msra.mxu0 0.0
    %1683 = vmatprep.subr.mxu0 0.0
    %1684 = vmatpush1.xpose.msra.mxu0 0.0
    %1685 = vmatprep.subr.mxu0 0.0
    %1686 = vmatpush1.xpose.msra.mxu0 0.0
    %1687 = vmatprep.subr.mxu0 0.0
    %1688 = vmatpush1.xpose.msra.mxu0 0.0
    %1689 = vmatprep.mubr.f32.mxu0 0.0
    %1690 = vmatmul.mubr.f32.gmra.mrb[0].mxu0 %v1621
    %v1691 = vpop.f32.mrb[0].mxu0
    %v1692 = vadd.f32 0.0, %v1691
    %v1693 = vpop.f32.mrb[0].mxu0
    %1694 = vdwg.mxu0
    %v1695 = vmul.f32 %v1692, 0.35355338
    %v1696 = vsel %vm179, %v1695, -inf
    %1697 = vmax.xlane.f32.xlu0 %v1696
    %v1698 = vpop.xlane.xlu0 %1697
    %v1699 = vsub.f32 %v1695, %v1698
    %v1700 = vmul.f32 %v1699, 1.442695
    %v1701 = vpow.pop %v1700
    %v1702 = vsel %vm179, %v1701, 0.0
    %1703 = vadd.xlane.f32.xlu0 %v1702
    %v1704 = vpop.xlane.xlu0 %1703
    %v1705 = vrcp.pop %v1704
    %v1706 = vmul.f32 %v1701, %v1705
    %1707 = vrot.lane.b32.xlu0 %v162, 48
    %v1708 = vpop.permute.xlu0 %1707
    %v1711 = vsel %vm179, %v1706, 0
    %1713 = vmatprep.subr.mxu0 0.0
    %1714 = vmatpush1.msra.mxu0 %v1708
    %1715 = vmatprep.subr.mxu0 0.0
    %1716 = vmatpush1.msra.mxu0 0.0
    %1717 = vmatprep.subr.mxu0 0.0
    %1718 = vmatpush1.msra.mxu0 0.0
    %1719 = vmatprep.subr.mxu0 0.0
    %1720 = vmatpush1.msra.mxu0 0.0
    %1721 = vmatprep.subr.mxu0 0.0
    %1722 = vmatpush1.msra.mxu0 0.0
    %1723 = vmatprep.subr.mxu0 0.0
    %1724 = vmatpush1.msra.mxu0 0.0
    %1725 = vmatprep.subr.mxu0 0.0
    %1726 = vmatpush1.msra.mxu0 0.0
    %1727 = vmatprep.subr.mxu0 0.0
    %1728 = vmatpush1.msra.mxu0 0.0
    %1729 = vmatprep.subr.mxu0 0.0
    %1730 = vmatpush1.msra.mxu0 0.0
    %1731 = vmatprep.subr.mxu0 0.0
    %1732 = vmatpush1.msra.mxu0 0.0
    %1733 = vmatprep.subr.mxu0 0.0
    %1734 = vmatpush1.msra.mxu0 0.0
    %1735 = vmatprep.subr.mxu0 0.0
    %1736 = vmatpush1.msra.mxu0 0.0
    %1737 = vmatprep.subr.mxu0 0.0
    %1738 = vmatpush1.msra.mxu0 0.0
    %1739 = vmatprep.subr.mxu0 0.0
    %1740 = vmatpush1.msra.mxu0 0.0
    %1741 = vmatprep.subr.mxu0 0.0
    %1742 = vmatpush1.msra.mxu0 0.0
    %1743 = vmatprep.subr.mxu0 0.0
    %1744 = vmatpush1.msra.mxu0 0.0
    %1745 = vmatprep.subr.mxu0 0.0
    %1746 = vmatpush1.msra.mxu0 0.0
    %1747 = vmatprep.subr.mxu0 0.0
    %1748 = vmatpush1.msra.mxu0 0.0
    %1749 = vmatprep.subr.mxu0 0.0
    %1750 = vmatpush1.msra.mxu0 0.0
    %1751 = vmatprep.subr.mxu0 0.0
    %1752 = vmatpush1.msra.mxu0 0.0
    %1753 = vmatprep.subr.mxu0 0.0
    %1754 = vmatpush1.msra.mxu0 0.0
    %1755 = vmatprep.subr.mxu0 0.0
    %1756 = vmatpush1.msra.mxu0 0.0
    %1757 = vmatprep.subr.mxu0 0.0
    %1758 = vmatpush1.msra.mxu0 0.0
    %1759 = vmatprep.subr.mxu0 0.0
    %1760 = vmatpush1.msra.mxu0 0.0
    %1761 = vmatprep.subr.mxu0 0.0
    %1762 = vmatpush1.msra.mxu0 0.0
    %1763 = vmatprep.subr.mxu0 0.0
    %1764 = vmatpush1.msra.mxu0 0.0
    %1765 = vmatprep.subr.mxu0 0.0
    %1766 = vmatpush1.msra.mxu0 0.0
    %1767 = vmatprep.subr.mxu0 0.0
    %1768 = vmatpush1.msra.mxu0 0.0
    %1769 = vmatprep.subr.mxu0 0.0
    %1770 = vmatpush1.msra.mxu0 0.0
    %1771 = vmatprep.subr.mxu0 0.0
    %1772 = vmatpush1.msra.mxu0 0.0
    %1773 = vmatprep.subr.mxu0 0.0
    %1774 = vmatpush1.msra.mxu0 0.0
    %1775 = vmatprep.subr.mxu0 0.0
    %1776 = vmatpush1.msra.mxu0 0.0
    %1777 = vmatprep.mubr.f32.mxu0 0.0
    %1778 = vmatmul.mubr.f32.gmra.mrb[0].mxu0 %v1711
    %v1779 = vpop.f32.mrb[0].mxu0
    %v1780 = vadd.f32 0.0, %v1779
    %v1781 = vpop.f32.mrb[0].mxu0
    %1782 = vdwg.mxu0
    %v1784 = vsel %vm179, %v1780, 0
    %1786 = vmatprep.subr.mxu0 0.0
    %1787 = vmatpush1.msra.mxu0 %v167
    %1788 = vmatprep.subr.mxu0 0.0
    %1789 = vmatpush1.msra.mxu0 0.0
    %1790 = vmatprep.subr.mxu0 0.0
    %1791 = vmatpush1.msra.mxu0 0.0
    %1792 = vmatprep.subr.mxu0 0.0
    %1793 = vmatpush1.msra.mxu0 0.0
    %1794 = vmatprep.subr.mxu0 0.0
    %1795 = vmatpush1.msra.mxu0 0.0
    %1796 = vmatprep.subr.mxu0 0.0
    %1797 = vmatpush1.msra.mxu0 0.0
    %1798 = vmatprep.subr.mxu0 0.0
    %1799 = vmatpush1.msra.mxu0 0.0
    %1800 = vmatprep.subr.mxu0 0.0
    %1801 = vmatpush1.msra.mxu0 0.0
    %1802 = vmatprep.subr.mxu0 0.0
    %1803 = vmatpush1.msra.mxu0 0.0
    %1804 = vmatprep.subr.mxu0 0.0
    %1805 = vmatpush1.msra.mxu0 0.0
    %1806 = vmatprep.subr.mxu0 0.0
    %1807 = vmatpush1.msra.mxu0 0.0
    %1808 = vmatprep.subr.mxu0 0.0
    %1809 = vmatpush1.msra.mxu0 0.0
    %1810 = vmatprep.subr.mxu0 0.0
    %1811 = vmatpush1.msra.mxu0 0.0
    %1812 = vmatprep.subr.mxu0 0.0
    %1813 = vmatpush1.msra.mxu0 0.0
    %1814 = vmatprep.subr.mxu0 0.0
    %1815 = vmatpush1.msra.mxu0 0.0
    %1816 = vmatprep.subr.mxu0 0.0
    %1817 = vmatpush1.msra.mxu0 0.0
    %1818 = vmatprep.subr.mxu0 0.0
    %1819 = vmatpush1.msra.mxu0 0.0
    %1820 = vmatprep.subr.mxu0 0.0
    %1821 = vmatpush1.msra.mxu0 0.0
    %1822 = vmatprep.subr.mxu0 0.0
    %1823 = vmatpush1.msra.mxu0 0.0
    %1824 = vmatprep.subr.mxu0 0.0
    %1825 = vmatpush1.msra.mxu0 0.0
    %1826 = vmatprep.subr.mxu0 0.0
    %1827 = vmatpush1.msra.mxu0 0.0
    %1828 = vmatprep.subr.mxu0 0.0
    %1829 = vmatpush1.msra.mxu0 0.0
    %1830 = vmatprep.subr.mxu0 0.0
    %1831 = vmatpush1.msra.mxu0 0.0
    %1832 = vmatprep.subr.mxu0 0.0
    %1833 = vmatpush1.msra.mxu0 0.0
    %1834 = vmatprep.subr.mxu0 0.0
    %1835 = vmatpush1.msra.mxu0 0.0
    %1836 = vmatprep.subr.mxu0 0.0
    %1837 = vmatpush1.msra.mxu0 0.0
    %1838 = vmatprep.subr.mxu0 0.0
    %1839 = vmatpush1.msra.mxu0 0.0
    %1840 = vmatprep.subr.mxu0 0.0
    %1841 = vmatpush1.msra.mxu0 0.0
    %1842 = vmatprep.subr.mxu0 0.0
    %1843 = vmatpush1.msra.mxu0 0.0
    %1844 = vmatprep.subr.mxu0 0.0
    %1845 = vmatpush1.msra.mxu0 0.0
    %1846 = vmatprep.subr.mxu0 0.0
    %1847 = vmatpush1.msra.mxu0 0.0
    %1848 = vmatprep.subr.mxu0 0.0
    %1849 = vmatpush1.msra.mxu0 0.0
    %1850 = vmatprep.mubr.f32.mxu0 0.0
    %1851 = vmatmul.mubr.f32.gmra.mrb[0].mxu0 %v1784
    %v1852 = vpop.f32.mrb[0].mxu0
    %v1853 = vadd.f32 0.0, %v1852
    %v1854 = vpop.f32.mrb[0].mxu0
    %1855 = vdwg.mxu0
    %v1856 = vadd.f32 %v1616, %v1853
    %1857 = vrot.lane.b32.xlu0 %v162, 104
    %v1858 = vpop.permute.xlu0 %1857
    %1859 = vrot.lane.b32.xlu0 %v162, 72
    %v1860 = vpop.permute.xlu0 %1859
    %v1861 = vsel %vm179, %v1858, 0
    %v1863 = vsel %vm179, %v1860, 0
    %1865 = vmatprep.subr.mxu0 0.0
    %1866 = vmatpush1.xpose.msra.mxu0 %v1863
    %1867 = vmatprep.subr.mxu0 0.0
    %1868 = vmatpush1.xpose.msra.mxu0 0.0
    %1869 = vmatprep.subr.mxu0 0.0
    %1870 = vmatpush1.xpose.msra.mxu0 0.0
    %1871 = vmatprep.subr.mxu0 0.0
    %1872 = vmatpush1.xpose.msra.mxu0 0.0
    %1873 = vmatprep.subr.mxu0 0.0
    %1874 = vmatpush1.xpose.msra.mxu0 0.0
    %1875 = vmatprep.subr.mxu0 0.0
    %1876 = vmatpush1.xpose.msra.mxu0 0.0
    %1877 = vmatprep.subr.mxu0 0.0
    %1878 = vmatpush1.xpose.msra.mxu0 0.0
    %1879 = vmatprep.subr.mxu0 0.0
    %1880 = vmatpush1.xpose.msra.mxu0 0.0
    %1881 = vmatprep.subr.mxu0 0.0
    %1882 = vmatpush1.xpose.msra.mxu0 0.0
    %1883 = vmatprep.subr.mxu0 0.0
    %1884 = vmatpush1.xpose.msra.mxu0 0.0
    %1885 = vmatprep.subr.mxu0 0.0
    %1886 = vmatpush1.xpose.msra.mxu0 0.0
    %1887 = vmatprep.subr.mxu0 0.0
    %1888 = vmatpush1.xpose.msra.mxu0 0.0
    %1889 = vmatprep.subr.mxu0 0.0
    %1890 = vmatpush1.xpose.msra.mxu0 0.0
    %1891 = vmatprep.subr.mxu0 0.0
    %1892 = vmatpush1.xpose.msra.mxu0 0.0
    %1893 = vmatprep.subr.mxu0 0.0
    %1894 = vmatpush1.xpose.msra.mxu0 0.0
    %1895 = vmatprep.subr.mxu0 0.0
    %1896 = vmatpush1.xpose.msra.mxu0 0.0
    %1897 = vmatprep.subr.mxu0 0.0
    %1898 = vmatpush1.xpose.msra.mxu0 0.0
    %1899 = vmatprep.subr.mxu0 0.0
    %1900 = vmatpush1.xpose.msra.mxu0 0.0
    %1901 = vmatprep.subr.mxu0 0.0
    %1902 = vmatpush1.xpose.msra.mxu0 0.0
    %1903 = vmatprep.subr.mxu0 0.0
    %1904 = vmatpush1.xpose.msra.mxu0 0.0
    %1905 = vmatprep.subr.mxu0 0.0
    %1906 = vmatpush1.xpose.msra.mxu0 0.0
    %1907 = vmatprep.subr.mxu0 0.0
    %1908 = vmatpush1.xpose.msra.mxu0 0.0
    %1909 = vmatprep.subr.mxu0 0.0
    %1910 = vmatpush1.xpose.msra.mxu0 0.0
    %1911 = vmatprep.subr.mxu0 0.0
    %1912 = vmatpush1.xpose.msra.mxu0 0.0
    %1913 = vmatprep.subr.mxu0 0.0
    %1914 = vmatpush1.xpose.msra.mxu0 0.0
    %1915 = vmatprep.subr.mxu0 0.0
    %1916 = vmatpush1.xpose.msra.mxu0 0.0
    %1917 = vmatprep.subr.mxu0 0.0
    %1918 = vmatpush1.xpose.msra.mxu0 0.0
    %1919 = vmatprep.subr.mxu0 0.0
    %1920 = vmatpush1.xpose.msra.mxu0 0.0
    %1921 = vmatprep.subr.mxu0 0.0
    %1922 = vmatpush1.xpose.msra.mxu0 0.0
    %1923 = vmatprep.subr.mxu0 0.0
    %1924 = vmatpush1.xpose.msra.mxu0 0.0
    %1925 = vmatprep.subr.mxu0 0.0
    %1926 = vmatpush1.xpose.msra.mxu0 0.0
    %1927 = vmatprep.subr.mxu0 0.0
    %1928 = vmatpush1.xpose.msra.mxu0 0.0
    %1929 = vmatprep.mubr.f32.mxu0 0.0
    %1930 = vmatmul.mubr.f32.gmra.mrb[0].mxu0 %v1861
    %v1931 = vpop.f32.mrb[0].mxu0
    %v1932 = vadd.f32 0.0, %v1931
    %v1933 = vpop.f32.mrb[0].mxu0
    %1934 = vdwg.mxu0
    %v1935 = vmul.f32 %v1932, 0.35355338
    %v1936 = vsel %vm179, %v1935, -inf
    %1937 = vmax.xlane.f32.xlu0 %v1936
    %v1938 = vpop.xlane.xlu0 %1937
    %v1939 = vsub.f32 %v1935, %v1938
    %v1940 = vmul.f32 %v1939, 1.442695
    %v1941 = vpow.pop %v1940
    %v1942 = vsel %vm179, %v1941, 0.0
    %1943 = vadd.xlane.f32.xlu0 %v1942
    %v1944 = vpop.xlane.xlu0 %1943
    %v1945 = vrcp.pop %v1944
    %v1946 = vmul.f32 %v1941, %v1945
    %1947 = vrot.lane.b32.xlu0 %v162, 40
    %v1948 = vpop.permute.xlu0 %1947
    %v1951 = vsel %vm179, %v1946, 0
    %1953 = vmatprep.subr.mxu0 0.0
    %1954 = vmatpush1.msra.mxu0 %v1948
    %1955 = vmatprep.subr.mxu0 0.0
    %1956 = vmatpush1.msra.mxu0 0.0
    %1957 = vmatprep.subr.mxu0 0.0
    %1958 = vmatpush1.msra.mxu0 0.0
    %1959 = vmatprep.subr.mxu0 0.0
    %1960 = vmatpush1.msra.mxu0 0.0
    %1961 = vmatprep.subr.mxu0 0.0
    %1962 = vmatpush1.msra.mxu0 0.0
    %1963 = vmatprep.subr.mxu0 0.0
    %1964 = vmatpush1.msra.mxu0 0.0
    %1965 = vmatprep.subr.mxu0 0.0
    %1966 = vmatpush1.msra.mxu0 0.0
    %1967 = vmatprep.subr.mxu0 0.0
    %1968 = vmatpush1.msra.mxu0 0.0
    %1969 = vmatprep.subr.mxu0 0.0
    %1970 = vmatpush1.msra.mxu0 0.0
    %1971 = vmatprep.subr.mxu0 0.0
    %1972 = vmatpush1.msra.mxu0 0.0
    %1973 = vmatprep.subr.mxu0 0.0
    %1974 = vmatpush1.msra.mxu0 0.0
    %1975 = vmatprep.subr.mxu0 0.0
    %1976 = vmatpush1.msra.mxu0 0.0
    %1977 = vmatprep.subr.mxu0 0.0
    %1978 = vmatpush1.msra.mxu0 0.0
    %1979 = vmatprep.subr.mxu0 0.0
    %1980 = vmatpush1.msra.mxu0 0.0
    %1981 = vmatprep.subr.mxu0 0.0
    %1982 = vmatpush1.msra.mxu0 0.0
    %1983 = vmatprep.subr.mxu0 0.0
    %1984 = vmatpush1.msra.mxu0 0.0
    %1985 = vmatprep.subr.mxu0 0.0
    %1986 = vmatpush1.msra.mxu0 0.0
    %1987 = vmatprep.subr.mxu0 0.0
    %1988 = vmatpush1.msra.mxu0 0.0
    %1989 = vmatprep.subr.mxu0 0.0
    %1990 = vmatpush1.msra.mxu0 0.0
    %1991 = vmatprep.subr.mxu0 0.0
    %1992 = vmatpush1.msra.mxu0 0.0
    %1993 = vmatprep.subr.mxu0 0.0
    %1994 = vmatpush1.msra.mxu0 0.0
    %1995 = vmatprep.subr.mxu0 0.0
    %1996 = vmatpush1.msra.mxu0 0.0
    %1997 = vmatprep.subr.mxu0 0.0
    %1998 = vmatpush1.msra.mxu0 0.0
    %1999 = vmatprep.subr.mxu0 0.0
    %2000 = vmatpush1.msra.mxu0 0.0
    %2001 = vmatprep.subr.mxu0 0.0
    %2002 = vmatpush1.msra.mxu0 0.0
    %2003 = vmatprep.subr.mxu0 0.0
    %2004 = vmatpush1.msra.mxu0 0.0
    %2005 = vmatprep.subr.mxu0 0.0
    %2006 = vmatpush1.msra.mxu0 0.0
    %2007 = vmatprep.subr.mxu0 0.0
    %2008 = vmatpush1.msra.mxu0 0.0
    %2009 = vmatprep.subr.mxu0 0.0
    %2010 = vmatpush1.msra.mxu0 0.0
    %2011 = vmatprep.subr.mxu0 0.0
    %2012 = vmatpush1.msra.mxu0 0.0
    %2013 = vmatprep.subr.mxu0 0.0
    %2014 = vmatpush1.msra.mxu0 0.0
    %2015 = vmatprep.subr.mxu0 0.0
    %2016 = vmatpush1.msra.mxu0 0.0
    %2017 = vmatprep.mubr.f32.mxu0 0.0
    %2018 = vmatmul.mubr.f32.gmra.mrb[0].mxu0 %v1951
    %v2019 = vpop.f32.mrb[0].mxu0
    %v2020 = vadd.f32 0.0, %v2019
    %v2021 = vpop.f32.mrb[0].mxu0
    %2022 = vdwg.mxu0
    %v2024 = vsel %vm179, %v2020, 0
    %2026 = vmatprep.subr.mxu0 0.0
    %2027 = vmatpush1.msra.mxu0 %v168
    %2028 = vmatprep.subr.mxu0 0.0
    %2029 = vmatpush1.msra.mxu0 0.0
    %2030 = vmatprep.subr.mxu0 0.0
    %2031 = vmatpush1.msra.mxu0 0.0
    %2032 = vmatprep.subr.mxu0 0.0
    %2033 = vmatpush1.msra.mxu0 0.0
    %2034 = vmatprep.subr.mxu0 0.0
    %2035 = vmatpush1.msra.mxu0 0.0
    %2036 = vmatprep.subr.mxu0 0.0
    %2037 = vmatpush1.msra.mxu0 0.0
    %2038 = vmatprep.subr.mxu0 0.0
    %2039 = vmatpush1.msra.mxu0 0.0
    %2040 = vmatprep.subr.mxu0 0.0
    %2041 = vmatpush1.msra.mxu0 0.0
    %2042 = vmatprep.subr.mxu0 0.0
    %2043 = vmatpush1.msra.mxu0 0.0
    %2044 = vmatprep.subr.mxu0 0.0
    %2045 = vmatpush1.msra.mxu0 0.0
    %2046 = vmatprep.subr.mxu0 0.0
    %2047 = vmatpush1.msra.mxu0 0.0
    %2048 = vmatprep.subr.mxu0 0.0
    %2049 = vmatpush1.msra.mxu0 0.0
    %2050 = vmatprep.subr.mxu0 0.0
    %2051 = vmatpush1.msra.mxu0 0.0
    %2052 = vmatprep.subr.mxu0 0.0
    %2053 = vmatpush1.msra.mxu0 0.0
    %2054 = vmatprep.subr.mxu0 0.0
    %2055 = vmatpush1.msra.mxu0 0.0
    %2056 = vmatprep.subr.mxu0 0.0
    %2057 = vmatpush1.msra.mxu0 0.0
    %2058 = vmatprep.subr.mxu0 0.0
    %2059 = vmatpush1.msra.mxu0 0.0
    %2060 = vmatprep.subr.mxu0 0.0
    %2061 = vmatpush1.msra.mxu0 0.0
    %2062 = vmatprep.subr.mxu0 0.0
    %2063 = vmatpush1.msra.mxu0 0.0
    %2064 = vmatprep.subr.mxu0 0.0
    %2065 = vmatpush1.msra.mxu0 0.0
    %2066 = vmatprep.subr.mxu0 0.0
    %2067 = vmatpush1.msra.mxu0 0.0
    %2068 = vmatprep.subr.mxu0 0.0
    %2069 = vmatpush1.msra.mxu0 0.0
    %2070 = vmatprep.subr.mxu0 0.0
    %2071 = vmatpush1.msra.mxu0 0.0
    %2072 = vmatprep.subr.mxu0 0.0
    %2073 = vmatpush1.msra.mxu0 0.0
    %2074 = vmatprep.subr.mxu0 0.0
    %2075 = vmatpush1.msra.mxu0 0.0
    %2076 = vmatprep.subr.mxu0 0.0
    %2077 = vmatpush1.msra.mxu0 0.0
    %2078 = vmatprep.subr.mxu0 0.0
    %2079 = vmatpush1.msra.mxu0 0.0
    %2080 = vmatprep.subr.mxu0 0.0
    %2081 = vmatpush1.msra.mxu0 0.0
    %2082 = vmatprep.subr.mxu0 0.0
    %2083 = vmatpush1.msra.mxu0 0.0
    %2084 = vmatprep.subr.mxu0 0.0
    %2085 = vmatpush1.msra.mxu0 0.0
    %2086 = vmatprep.subr.mxu0 0.0
    %2087 = vmatpush1.msra.mxu0 0.0
    %2088 = vmatprep.subr.mxu0 0.0
    %2089 = vmatpush1.msra.mxu0 0.0
    %2090 = vmatprep.mubr.f32.mxu0 0.0
    %2091 = vmatmul.mubr.f32.gmra.mrb[0].mxu0 %v2024
    %v2092 = vpop.f32.mrb[0].mxu0
    %v2093 = vadd.f32 0.0, %v2092
    %v2094 = vpop.f32.mrb[0].mxu0
    %2095 = vdwg.mxu0
    %v2096 = vadd.f32 %v1856, %v2093
    %2097 = vst.msk [vmem:[#allocation8 + $0x8] sm:$0xff] %vm1136, %v2096
    // Predicated region
    $region34: #{tpu_custom_call.1} parent=1 // pred_check
      _
    $region35: #{tpu_custom_call.1} parent=1 // pred_check_branch
      %2099 = sbr.rel (0) target = $region37
    $region36: #{tpu_custom_call.1} parent=1 // pred_region
      %s2101 = ssub.s32 256, 256
      %2102 = vsyncadd [#allocation4], %s2101
      %s2103 = sshll.u32 [#allocation8], 4
      %s2104 = int_to_ptr.vmem [resolvable:$true] %s2103
      %2109 = dma.vmem_to_hbm [thread:$0]  %s2104, 256, %s5, [#allocation4], 128, 128, 8
    $region37: #{tpu_custom_call.1} parent=1 // pred_fallthru
      _
    // Predicated region
    $region38: #{tpu_custom_call.1} parent=1 // pred_check
      _
    $region39: #{tpu_custom_call.1} parent=1 // pred_check_branch
      %2111 = sbr.rel (0) target = $region41
    $region40: #{tpu_custom_call.1} parent=1 // pred_region
      %2112 = dma.done [#allocation4], 256
    $region41: #{tpu_custom_call.1} parent=1 // pred_fallthru
      _
    %2113 = vsyncpa [#allocation3], 1
    %2114 = vsyncpa [#allocation6], 1
    %2115 = vsyncpa [#allocation4], 1

</llo_original>
